<compile_context>
chip_gen: v7x
topology: tpu7x:2x2x1
jax: 0.10.0
libtpu: 0.0.40
codegen_flags: <defaults>
</compile_context>

<pallas_src>
import functools
import math

import jax
import jax.numpy as jnp
from jax import lax
from jax.experimental import pallas as pl
from jax.experimental.pallas import tpu as pltpu


# --------------------------------------------------------------------------- #
# Pallas kernel: per-(sample, HW-chunk) masked-MSE partial reductions
# --------------------------------------------------------------------------- #
def _maskd_stage_kernel(hw, ys_ref, yt_ref, tok_ref, loss_ref, msum_ref, csum_ref):
    """One (batch n, HW-chunk) grid step.

    ys_ref, yt_ref : (1, C, CHUNK) f32  student / teacher chunk, native NCHW layout
                     (HW on lanes -> lane-dense sigmoid / diff / reductions)
    tok_ref        : (T, C)        f32  mask tokens (native layout, no transpose)
    loss_ref       : (1, T, 1)     f32  accumulates sum_hw (sum_c diff^2) * mask^2
    msum_ref       : (1, T, 1)     f32  accumulates sum_hw mask
    csum_ref       : (1, C, 1)     f32  accumulates sum_hw y_t  (for the prob head)
    """
    c_idx = pl.program_id(1)
    chunk = ys_ref.shape[2]

    @pl.when(c_idx == 0)
    def _init():
        loss_ref[...] = jnp.zeros_like(loss_ref)
        msum_ref[...] = jnp.zeros_like(msum_ref)
        csum_ref[...] = jnp.zeros_like(csum_ref)

    ys = ys_ref[0]                                        # (C, CHUNK) f32
    yt = yt_ref[0]                                        # (C, CHUNK) f32

    # Tail handling when CHUNK does not divide HW: zero the out-of-range lanes
    # (unspecified DMA padding) before any arithmetic.
    tail = (hw % chunk) != 0
    if tail:
        lane = lax.broadcasted_iota(jnp.int32, (1, chunk), 1)
        valid = (c_idx * chunk + lane) < hw               # (1, CHUNK) bool
        ys = jnp.where(valid, ys, 0.0)
        yt = jnp.where(valid, yt, 0.0)

    # forward_mask: mask = sigmoid(mask_token @ k)  ->  (T, C) @ (C, CHUNK) on MXU.
    attn = jnp.dot(tok_ref[...], yt, preferred_element_type=jnp.float32)  # (T, CHUNK)
    mask = jax.nn.sigmoid(attn)
    if tail:
        mask = jnp.where(valid, mask, 0.0)                # sigmoid(0)=0.5 in padding

    # Masked-MSE identity:  sum_hw sum_c ((ys-yt)*mask_t)^2
    #                     = sum_hw (sum_c diff^2) * mask_t^2
    diff = ys - yt                                        # (C, CHUNK) f32 exact
    d2 = jnp.sum(diff * diff, axis=0, keepdims=True)      # (1, CHUNK) sublane reduce

    # Lane reductions (XLU) are cheap relative to the HBM stream at these sizes;
    # an MXU ones-column dot would only matter for much larger T/C.
    loss_ref[0] += jnp.sum(mask * mask * d2, axis=1, keepdims=True)   # (T, 1)
    msum_ref[0] += jnp.sum(mask, axis=1, keepdims=True)               # (T, 1)
    csum_ref[0] += jnp.sum(yt, axis=1, keepdims=True)                 # (C, 1)


# --------------------------------------------------------------------------- #
# Generation-aware sizing
# --------------------------------------------------------------------------- #
def _vmem_capacity_bytes():
    try:
        return int(pltpu.get_tpu_info().vmem_capacity_bytes)
    except Exception:                                     # pragma: no cover
        return 64 * 1024 * 1024                           # conservative: v7x per-core


def _vmem_limit_bytes(vmem_cap):
    # <= half the generation's physical VMEM: 64 MiB on v5e/v6e, 32 MiB on v7x.
    return int(min(64 * 1024 * 1024, max(32 * 1024 * 1024, vmem_cap // 2)))


def _pick_chunk(hw, c, vmem_cap, itemsize=4):
    """Lane chunk of the flattened HW axis (multiple of 128, or the whole axis).

    Sized so the double-buffered streaming footprint (2 tensors x 2 buffers x
    (C, chunk) f32) stays within ~1/3 of this generation's VMEM, while keeping
    each streamed block around >= 512 KiB so the DMA sits on the HBM roofline.
    """
    budget = vmem_cap // 3
    max_chunk = budget // (2 * 2 * c * itemsize)
    max_chunk = max(128, (max_chunk // 128) * 128)
    if hw <= max_chunk:
        return hw                                         # one block covers the axis
    target = max(1024, (512 * 1024) // (c * itemsize))
    return min(max_chunk, ((target + 127) // 128) * 128)


# --------------------------------------------------------------------------- #
# Stage partial reductions: Pallas path + tiny-stage XLA fallback
# --------------------------------------------------------------------------- #
def _stage_partials_pallas(ys, yt, tok, *, chunk=None):
    """ys, yt: (N, C, HW) f32 native layout; tok: (T, C) f32."""
    N, C, HW = ys.shape
    T = tok.shape[0]
    vmem_cap = _vmem_capacity_bytes()
    if chunk is None:
        chunk = _pick_chunk(HW, C, vmem_cap)
    n_chunks = pl.cdiv(HW, chunk)

    kernel = functools.partial(_maskd_stage_kernel, HW)

    loss_sum, msum, csum = pl.pallas_call(
        kernel,
        out_shape=(jax.ShapeDtypeStruct((N, T, 1), jnp.float32),
                   jax.ShapeDtypeStruct((N, T, 1), jnp.float32),
                   jax.ShapeDtypeStruct((N, C, 1), jnp.float32)),
        grid_spec=pltpu.PrefetchScalarGridSpec(
            num_scalar_prefetch=0,
            grid=(N, n_chunks),
            in_specs=[
                pl.BlockSpec((1, C, chunk), lambda n, c: (n, 0, c)),   # y_s chunk
                pl.BlockSpec((1, C, chunk), lambda n, c: (n, 0, c)),   # y_t chunk
                pl.BlockSpec((T, C), lambda n, c: (0, 0)),             # mask tokens
            ],
            out_specs=[
                pl.BlockSpec((1, T, 1), lambda n, c: (n, 0, 0)),       # loss partials
                pl.BlockSpec((1, T, 1), lambda n, c: (n, 0, 0)),       # mask sums
                pl.BlockSpec((1, C, 1), lambda n, c: (n, 0, 0)),       # channel sums
            ],
        ),
        compiler_params=pltpu.CompilerParams(
            dimension_semantics=("parallel", "arbitrary"),
            vmem_limit_bytes=_vmem_limit_bytes(vmem_cap)),
    )(ys, yt, tok)
    return loss_sum[:, :, 0], msum[:, :, 0], csum[:, :, 0]


def _stage_partials_xla(ys, yt, tok):
    """Tiny-stage fallback (pure XLA): same partial reductions as the kernel."""
    mask = jax.nn.sigmoid(jnp.einsum("tc,nch->nth", tok, yt))          # (N, T, HW)
    d2 = jnp.sum((ys - yt) ** 2, axis=1)                               # (N, HW)
    loss_sum = jnp.einsum("nth,nh->nt", mask * mask, d2)               # (N, T)
    msum = jnp.sum(mask, axis=-1)                                      # (N, T)
    csum = jnp.sum(yt, axis=-1)                                        # (N, C)
    return loss_sum, msum, csum


def _finalize_stage(loss_sum, msum, csum, y_t, params):
    """Per-sample normalisation + the tiny prob head (conv3x3 -> GAP -> 1x1 -> softmax)."""
    N, C, H, W = y_t.shape
    w3 = params["w3"].astype(jnp.float32)                 # (C, C, 3, 3)
    b3 = params["b3"].astype(jnp.float32)                 # (C,)
    w1 = params["w1"].astype(jnp.float32)                 # (T, C)
    b1 = params["b1"].astype(jnp.float32)                 # (T,)

    # loss / mask_sum, then mean over channels -- exact f32 divide.
    loss_t = loss_sum / (msum * C)                        # (N, T)

    # conv3x3(SAME) + global-avg-pool collapsed onto the nine spatial tap sums
    # S[n,c,kh,kw]; rebuilt from the streamed per-channel total (csum) plus
    # O(N*C*(H+W)) border corrections (inclusion-exclusion over excluded rows/cols).
    yt = y_t.astype(jnp.float32)
    row0 = jnp.sum(yt[:, :, 0, :], axis=-1)               # (N, C)
    rowL = jnp.sum(yt[:, :, H - 1, :], axis=-1)
    col0 = jnp.sum(yt[:, :, :, 0], axis=-1)
    colL = jnp.sum(yt[:, :, :, W - 1], axis=-1)
    c00, c0L = yt[:, :, 0, 0], yt[:, :, 0, W - 1]
    cL0, cLL = yt[:, :, H - 1, 0], yt[:, :, H - 1, W - 1]
    zero = jnp.zeros_like(csum)
    row_ex = (rowL, zero, row0)                           # kh = 0: drop last row, kh = 2: drop first
    col_ex = (colL, zero, col0)                           # kw = 0: drop last col, kw = 2: drop first
    corner = ((cLL, zero, cL0),
              (zero, zero, zero),
              (c0L, zero, c00))
    S = jnp.stack([jnp.stack([csum - row_ex[kh] - col_ex[kw] + corner[kh][kw]
                              for kw in range(3)], axis=-1)
                   for kh in range(3)], axis=-2)          # (N, C, 3, 3)

    pooled = jnp.einsum("nckl,ockl->no", S, w3) / (H * W) + b3[None, :]   # (N, C)
    logits = pooled @ w1.T + b1[None, :]                  # (N, T)
    w = jax.nn.softmax(logits, axis=-1)                   # (N, T)
    return jnp.mean(jnp.sum(loss_t * w, axis=-1))


def maskd_stage_loss(y_s, y_t, params, *, chunk=None, min_pallas_bytes=256 * 1024):
    """One MaskModule stage of MasKDLoss.forward."""
    assert y_s.shape == y_t.shape
    N, C, H, W = y_s.shape
    HW = H * W

    tok = params["mask_token"].astype(jnp.float32)        # (T, C)
    ys = y_s.reshape(N, C, HW).astype(jnp.float32)        # free reshape, native layout
    yt = y_t.reshape(N, C, HW).astype(jnp.float32)

    feat_bytes = 2 * N * C * HW * 4
    if chunk is None and feat_bytes < min_pallas_bytes:
        # Tiny stage: pallas_call launch + wrapper prep dominate -> plain XLA.
        parts = _stage_partials_xla(ys, yt, tok)
    else:
        parts = _stage_partials_pallas(ys, yt, tok, chunk=chunk)
    return _finalize_stage(*parts, y_t, params)


def maskd_loss(y_s_list, y_t_list, params_list, loss_weight=1.0):
    assert len(y_s_list) == len(y_t_list) == len(params_list)
    total = jnp.float32(0.0)
    for y_s, y_t, p in zip(y_s_list, y_t_list, params_list):
        total = total + maskd_stage_loss(y_s, y_t, p)
    return loss_weight * total


# ---------------- pure-JAX reference (mirrors the PyTorch math) ---------------- #
def _ref_stage_loss(y_s, y_t, p):
    N, C, H, W = y_s.shape
    tok = p["mask_token"]
    T = tok.shape[0]
    k = y_t.reshape(N, C, H * W)
    mask = jax.nn.sigmoid(jnp.einsum("tc,nch->nth", tok, k)).reshape(N, T, H, W)
    m_s = y_s[:, None] * mask[:, :, None]
    m_t = y_t[:, None] * mask[:, :, None]
    loss = ((m_s - m_t) ** 2).sum((3, 4))
    loss = loss / mask.sum((2, 3))[..., None]
    conv = lax.conv_general_dilated(y_t, p["w3"], (1, 1), "SAME",
                                    dimension_numbers=("NCHW", "OIHW", "NCHW"))
    conv = conv + p["b3"][None, :, None, None]
    pooled = conv.mean((2, 3))[:, :, None, None]
    logits = lax.conv_general_dilated(pooled, p["w1"][:, :, None, None], (1, 1),
                                      "SAME",
                                      dimension_numbers=("NCHW", "OIHW", "NCHW"))
    logits = logits + p["b1"][None, :, None, None]
    w = jax.nn.softmax(logits, axis=1).reshape(N, T)
    return ((loss.mean(-1) * w).sum(-1)).mean()


if __name__ == "__main__":
    key = jax.random.PRNGKey(0)
    channels = (4, 8, 8)       # one MaskModule per stage
    spatials = (16, 8, 64)     # last stage HW=4096 -> Pallas path
    num_tokens = 6
    loss_weight = 1.0
    N = 2

    params_list, y_s_list, y_t_list = [], [], []
    for C, S in zip(channels, spatials):
        key, k1, k2, k3, k4, k5 = jax.random.split(key, 6)
        params = dict(
            # nn.Parameter(torch.randn(T, C).normal_(0, 0.01))
            mask_token=0.01 * jax.random.normal(k1, (num_tokens, C), jnp.float32),
            # Conv2d(C, C, 3, pad=1): normal(0, sqrt(2 / (3*3*C))), bias zero
            w3=math.sqrt(2.0 / (9 * C)) *
               jax.random.normal(k2, (C, C, 3, 3), jnp.float32),
            b3=jnp.zeros((C,), jnp.float32),
            # Conv2d(C, T, 1): normal(0, sqrt(2 / T)), bias zero
            w1=math.sqrt(2.0 / num_tokens) *
               jax.random.normal(k3, (num_tokens, C), jnp.float32),
            b1=jnp.zeros((num_tokens,), jnp.float32),
        )
        params_list.append(params)
        y_s_list.append(jax.random.normal(k4, (N, C, S, S), jnp.float32))
        y_t_list.append(jax.random.normal(k5, (N, C, S, S), jnp.float32))

    loss = maskd_loss(y_s_list, y_t_list, params_list, loss_weight=loss_weight)
    loss = jax.block_until_ready(loss)

    ref = loss_weight * sum(
        _ref_stage_loss(s, t, p)
        for s, t, p in zip(y_s_list, y_t_list, params_list))
    assert jnp.allclose(loss, ref, rtol=1e-3, atol=1e-5), (loss, ref)

    # Also exercise the multi-chunk + lane-masked-tail kernel path explicitly
    # (chunk=1536 -> 3 chunks over HW=4096 with a 1024-lane tail).
    big = maskd_stage_loss(y_s_list[-1], y_t_list[-1], params_list[-1], chunk=1536)
    big = jax.block_until_ready(big)
    big_ref = _ref_stage_loss(y_s_list[-1], y_t_list[-1], params_list[-1])
    assert jnp.allclose(big, big_ref, rtol=1e-3, atol=1e-5), (big, big_ref)

    print("KERNEL_OK")
</pallas_src>

<mosaic_0001>
module attributes {stable_mosaic.version = 11 : i64} {
  func.func @_maskd_stage_kernel(%arg0: i32, %arg1: i32, %arg2: memref<1x8x4096xf32, #tpu.memory_space<vmem>>, %arg3: memref<1x8x4096xf32, #tpu.memory_space<vmem>>, %arg4: memref<6x8xf32, #tpu.memory_space<vmem>>, %arg5: memref<1x6x1xf32, #tpu.memory_space<vmem>>, %arg6: memref<1x6x1xf32, #tpu.memory_space<vmem>>, %arg7: memref<1x8x1xf32, #tpu.memory_space<vmem>>) attributes {dimension_semantics = [#tpu.dimension_semantics<parallel>, #tpu.dimension_semantics<arbitrary>], iteration_bounds = array<i64: 2, 1>, scalar_prefetch = 0 : i64, scratch_operands = 0 : i64, tpu.core_type = #tpu.core_type<tc>, window_params = [{transform_indices = @transform_0, window_bounds = array<i64: 1, 8, 4096>}, {transform_indices = @transform_1, window_bounds = array<i64: 1, 8, 4096>}, {pipeline_mode = #tpu.pipeline_mode<synchronous>, transform_indices = @transform_2, window_bounds = array<i64: 6, 8>}, {transform_indices = @transform_3, window_bounds = array<i64: 1, 6, 1>}, {transform_indices = @transform_4, window_bounds = array<i64: 1, 6, 1>}, {transform_indices = @transform_5, window_bounds = array<i64: 1, 8, 1>}]} {
    %c0_i32 = arith.constant 0 : i32
    %0 = arith.cmpi eq, %arg1, %c0_i32 : i32
    %1 = arith.extui %0 : i1 to i32
    %c0_i32_0 = arith.constant 0 : i32
    %2 = arith.cmpi ne, %1, %c0_i32_0 : i32
    scf.if %2 {
      %cst_31 = arith.constant 0.000000e+00 : f32
      %45 = vector.broadcast %cst_31 : f32 to vector<1x6x1xf32>
      %c0_32 = arith.constant 0 : index
      %c0_33 = arith.constant 0 : index
      %c0_34 = arith.constant 0 : index
      %46 = vector.load %arg5[%c0_32, %c0_33, %c0_34] : memref<1x6x1xf32, #tpu.memory_space<vmem>>, vector<1x6x1xf32>
      tpu.vector_store %arg5[%c0_32, %c0_33, %c0_34], %45 {strides = array<i32>} : memref<1x6x1xf32, #tpu.memory_space<vmem>>, vector<1x6x1xf32>,
      %cst_35 = arith.constant 0.000000e+00 : f32
      %47 = vector.broadcast %cst_35 : f32 to vector<1x6x1xf32>
      %c0_36 = arith.constant 0 : index
      %c0_37 = arith.constant 0 : index
      %c0_38 = arith.constant 0 : index
      %48 = vector.load %arg6[%c0_36, %c0_37, %c0_38] : memref<1x6x1xf32, #tpu.memory_space<vmem>>, vector<1x6x1xf32>
      tpu.vector_store %arg6[%c0_36, %c0_37, %c0_38], %47 {strides = array<i32>} : memref<1x6x1xf32, #tpu.memory_space<vmem>>, vector<1x6x1xf32>,
      %cst_39 = arith.constant 0.000000e+00 : f32
      %49 = vector.broadcast %cst_39 : f32 to vector<1x8x1xf32>
      %c0_40 = arith.constant 0 : index
      %c0_41 = arith.constant 0 : index
      %c0_42 = arith.constant 0 : index
      %50 = vector.load %arg7[%c0_40, %c0_41, %c0_42] : memref<1x8x1xf32, #tpu.memory_space<vmem>>, vector<1x8x1xf32>
      tpu.vector_store %arg7[%c0_40, %c0_41, %c0_42], %49 {strides = array<i32>} : memref<1x8x1xf32, #tpu.memory_space<vmem>>, vector<1x8x1xf32>,
    } else {
    }
    %c0 = arith.constant 0 : index
    %c0_1 = arith.constant 0 : index
    %c0_2 = arith.constant 0 : index
    %3 = vector.load %arg2[%c0, %c0_1, %c0_2] : memref<1x8x4096xf32, #tpu.memory_space<vmem>>, vector<1x8x4096xf32>
    %4 = vector.shape_cast %3 : vector<1x8x4096xf32> to vector<8x4096xf32>
    %c0_3 = arith.constant 0 : index
    %c0_4 = arith.constant 0 : index
    %c0_5 = arith.constant 0 : index
    %5 = vector.load %arg3[%c0_3, %c0_4, %c0_5] : memref<1x8x4096xf32, #tpu.memory_space<vmem>>, vector<1x8x4096xf32>
    %6 = vector.shape_cast %5 : vector<1x8x4096xf32> to vector<8x4096xf32>
    %c0_6 = arith.constant 0 : index
    %c0_7 = arith.constant 0 : index
    %7 = vector.load %arg4[%c0_6, %c0_7] : memref<6x8xf32, #tpu.memory_space<vmem>>, vector<6x8xf32>
    %cst = arith.constant dense<0.000000e+00> : vector<6x4096xf32>
    %8 = tpu.matmul %7, %6, %cst {dimension_numbers = #tpu.dot_dimension_numbers<[1], [0], [0], [1], [0, 0, 1, 1], [], []>} : vector<6x8xf32>, vector<8x4096xf32>, vector<6x4096xf32> -> vector<6x4096xf32>
    %9 = arith.negf %8 : vector<6x4096xf32>
    %10 = math.exp %9 : vector<6x4096xf32>
    %cst_8 = arith.constant 1.000000e+00 : f32
    %11 = vector.broadcast %cst_8 : f32 to vector<6x4096xf32>
    %12 = arith.addf %11, %10 : vector<6x4096xf32>
    %13 = arith.divf %11, %12 : vector<6x4096xf32>
    %14 = arith.subf %4, %6 : vector<8x4096xf32>
    %15 = arith.mulf %14, %14 : vector<8x4096xf32>
    %cst_9 = arith.constant dense<0.000000e+00> : vector<4096xf32>
    %16 = vector.multi_reduction <add>, %15, %cst_9 [0] : vector<8x4096xf32> to vector<4096xf32>
    %17 = vector.shape_cast %16 : vector<4096xf32> to vector<1x4096xf32>
    %c0_10 = arith.constant 0 : index
    %c0_11 = arith.constant 0 : index
    %c0_12 = arith.constant 0 : index
    %18 = vector.load %arg5[%c0_10, %c0_11, %c0_12] : memref<1x6x1xf32, #tpu.memory_space<vmem>>, vector<1x6x1xf32>
    %19 = vector.shape_cast %18 : vector<1x6x1xf32> to vector<6x1xf32>
    %20 = arith.mulf %13, %13 : vector<6x4096xf32>
    %21 = vector.broadcast %17 : vector<1x4096xf32> to vector<6x4096xf32>
    %22 = arith.mulf %20, %21 : vector<6x4096xf32>
    %cst_13 = arith.constant dense<0.000000e+00> : vector<6xf32>
    %23 = vector.multi_reduction <add>, %22, %cst_13 [1] : vector<6x4096xf32> to vector<6xf32>
    %24 = vector.shape_cast %23 : vector<6xf32> to vector<6x1xf32>
    %25 = arith.addf %19, %24 : vector<6x1xf32>
    %c0_14 = arith.constant 0 : index
    %c0_15 = arith.constant 0 : index
    %c0_16 = arith.constant 0 : index
    %26 = vector.load %arg5[%c0_14, %c0_15, %c0_16] : memref<1x6x1xf32, #tpu.memory_space<vmem>>, vector<1x6x1xf32>
    %27 = vector.shape_cast %26 : vector<1x6x1xf32> to vector<6x1xf32>
    %28 = vector.shape_cast %25 : vector<6x1xf32> to vector<1x6x1xf32>
    tpu.vector_store %arg5[%c0_14, %c0_15, %c0_16], %28 {strides = array<i32>} : memref<1x6x1xf32, #tpu.memory_space<vmem>>, vector<1x6x1xf32>,
    %c0_17 = arith.constant 0 : index
    %c0_18 = arith.constant 0 : index
    %c0_19 = arith.constant 0 : index
    %29 = vector.load %arg6[%c0_17, %c0_18, %c0_19] : memref<1x6x1xf32, #tpu.memory_space<vmem>>, vector<1x6x1xf32>
    %30 = vector.shape_cast %29 : vector<1x6x1xf32> to vector<6x1xf32>
    %cst_20 = arith.constant dense<0.000000e+00> : vector<6xf32>
    %31 = vector.multi_reduction <add>, %13, %cst_20 [1] : vector<6x4096xf32> to vector<6xf32>
    %32 = vector.shape_cast %31 : vector<6xf32> to vector<6x1xf32>
    %33 = arith.addf %30, %32 : vector<6x1xf32>
    %c0_21 = arith.constant 0 : index
    %c0_22 = arith.constant 0 : index
    %c0_23 = arith.constant 0 : index
    %34 = vector.load %arg6[%c0_21, %c0_22, %c0_23] : memref<1x6x1xf32, #tpu.memory_space<vmem>>, vector<1x6x1xf32>
    %35 = vector.shape_cast %34 : vector<1x6x1xf32> to vector<6x1xf32>
    %36 = vector.shape_cast %33 : vector<6x1xf32> to vector<1x6x1xf32>
    tpu.vector_store %arg6[%c0_21, %c0_22, %c0_23], %36 {strides = array<i32>} : memref<1x6x1xf32, #tpu.memory_space<vmem>>, vector<1x6x1xf32>,
    %c0_24 = arith.constant 0 : index
    %c0_25 = arith.constant 0 : index
    %c0_26 = arith.constant 0 : index
    %37 = vector.load %arg7[%c0_24, %c0_25, %c0_26] : memref<1x8x1xf32, #tpu.memory_space<vmem>>, vector<1x8x1xf32>
    %38 = vector.shape_cast %37 : vector<1x8x1xf32> to vector<8x1xf32>
    %cst_27 = arith.constant dense<0.000000e+00> : vector<8xf32>
    %39 = vector.multi_reduction <add>, %6, %cst_27 [1] : vector<8x4096xf32> to vector<8xf32>
    %40 = vector.shape_cast %39 : vector<8xf32> to vector<8x1xf32>
    %41 = arith.addf %38, %40 : vector<8x1xf32>
    %c0_28 = arith.constant 0 : index
    %c0_29 = arith.constant 0 : index
    %c0_30 = arith.constant 0 : index
    %42 = vector.load %arg7[%c0_28, %c0_29, %c0_30] : memref<1x8x1xf32, #tpu.memory_space<vmem>>, vector<1x8x1xf32>
    %43 = vector.shape_cast %42 : vector<1x8x1xf32> to vector<8x1xf32>
    %44 = vector.shape_cast %41 : vector<8x1xf32> to vector<1x8x1xf32>
    tpu.vector_store %arg7[%c0_28, %c0_29, %c0_30], %44 {strides = array<i32>} : memref<1x8x1xf32, #tpu.memory_space<vmem>>, vector<1x8x1xf32>,
    return
  }
  func.func @transform_0(%arg0: i32, %arg1: i32) -> (i32, i32, i32) {
    %c0_i32 = arith.constant 0 : i32
    %c0_i32_0 = arith.constant 0 : i32
    return %arg0, %c0_i32, %arg1 : i32, i32, i32
  }
  func.func @transform_1(%arg0: i32, %arg1: i32) -> (i32, i32, i32) {
    %c0_i32 = arith.constant 0 : i32
    %c0_i32_0 = arith.constant 0 : i32
    return %arg0, %c0_i32, %arg1 : i32, i32, i32
  }
  func.func @transform_2(%arg0: i32, %arg1: i32) -> (i32, i32) {
    %c0_i32 = arith.constant 0 : i32
    %c0_i32_0 = arith.constant 0 : i32
    %c0_i32_1 = arith.constant 0 : i32
    return %c0_i32, %c0_i32_0 : i32, i32
  }
  func.func @transform_3(%arg0: i32, %arg1: i32) -> (i32, i32, i32) {
    %c0_i32 = arith.constant 0 : i32
    %c0_i32_0 = arith.constant 0 : i32
    %c0_i32_1 = arith.constant 0 : i32
    return %arg0, %c0_i32, %c0_i32_0 : i32, i32, i32
  }
  func.func @transform_4(%arg0: i32, %arg1: i32) -> (i32, i32, i32) {
    %c0_i32 = arith.constant 0 : i32
    %c0_i32_0 = arith.constant 0 : i32
    %c0_i32_1 = arith.constant 0 : i32
    return %arg0, %c0_i32, %c0_i32_0 : i32, i32, i32
  }
  func.func @transform_5(%arg0: i32, %arg1: i32) -> (i32, i32, i32) {
    %c0_i32 = arith.constant 0 : i32
    %c0_i32_0 = arith.constant 0 : i32
    %c0_i32_1 = arith.constant 0 : i32
    return %arg0, %c0_i32, %c0_i32_0 : i32, i32, i32
  }
}

</mosaic_0001>

<llo_original>
// kernel: tpu_custom_call.1
$region0: #{tpu_custom_call.1}
  #allocation0 [shape = 'u32[]', space=smem, size = 0x4, offset = 0x4, fixed_abs, tag = 'smem constant byte address 0x4 - core index']
  #allocation1 [shape = 'u32[144,128]{1,0:T(1,128)}', space=vmem, size = 0x12000, scoped, tag = 'internal scratch']
  %s0 = inlined_call_operand.hbm [shape: f32[2,8,4096], index: 0, kind: input, shape index: {}]
  %s1 = inlined_call_operand.hbm [shape: f32[2,8,4096], index: 1, kind: input, shape index: {}]
  %s2 = inlined_call_operand.hbm [shape: f32[6,8], index: 2, kind: input, shape index: {}]
  %s3 = inlined_call_operand.vmem [shape: f32[2,6,1], index: 3, kind: output, shape index: {0}]
  %s4 = inlined_call_operand.vmem [shape: f32[2,6,1], index: 4, kind: output, shape index: {1}]
  %s5 = inlined_call_operand.vmem [shape: f32[2,8,1], index: 5, kind: output, shape index: {2}]
  %6 = xla_tuple %s3, %s4, %s5
  %s7 = sld [smem:[#allocation0]]
  $region77: #{tpu_custom_call.1} parent=0
    _
  %s9 = ssub.s32 1, %s7
  %s10 = scalar_select 0, %s9, %s7
  $region1: #{tpu_custom_call.1} parent=0
    #allocation2 [shape = 'u8[262144]{0}', space=vmem, size = 0x40000, scoped, tag = 'input window, operand 0']
    #allocation3 [shape = 's32[2]{0}', space=sflag, size = 0x8, scoped, tag = 'scoped memory for tpu_custom_call.1']
    #allocation4 [shape = 'u8[262144]{0}', space=vmem, size = 0x40000, scoped, tag = 'input window, operand 1']
    #allocation5 [shape = 's32[2]{0}', space=sflag, size = 0x8, scoped, tag = 'scoped memory for tpu_custom_call.1']
    #allocation6 [shape = 'u8[4096]{0}', space=vmem, size = 0x1000, scoped, tag = 'input window, operand 2, single buffered']
    %11 = vsyncpa [#allocation3], 0
    %s12 = scalar_lea.sflag [#allocation3], 1
    %13 = vsyncpa %s12, 0
    %14 = vsyncpa [#allocation5], 0
    %s15 = scalar_lea.sflag [#allocation5], 1
    %16 = vsyncpa %s15, 0
    loop: start=0, step=1, limit=4
    $region2: #{tpu_custom_call.1} parent=1 // loop_pre_header
      _
    $region3: #{tpu_custom_call.1} parent=1 // loop_header
      %s18 = sphi 0, %s22
      %p19 = scmp.ge.s32.totalorder %s18, 4
      %s25 = sphi 0, %s37
      %s26 = sphi 0, %s33
      %s27 = sphi 0, %s25
      %s28 = sphi 0, %s26
      %s29 = sphi 0, %s27
      %s30 = sphi 0, %s28
      %s42 = sphi 0, %s44
      %s45 = sphi 0, %s42
      %s46 = sphi 0, %s45
      %s62 = sphi 0, %s46
      %s70 = sphi 0, %s72
      %s73 = sphi 0, %s70
      %s74 = sphi 0, %s73
      %s90 = sphi 0, %s74
      %s94 = sphi 0, %s94
      %s96 = sphi 0, %s94
      %s97 = sphi 0, %s96
      %s111 = sphi 0, %s97
      %s117 = sphi 0, %s119
      %s120 = sphi 0, %s117
      %s121 = sphi 0, %s120
      %s137 = sphi 0, %s121
      %s143 = sphi 0, %s145
      %s146 = sphi 0, %s143
      %s147 = sphi 0, %s146
      %s163 = sphi 0, %s147
      %s169 = sphi 0, %s171
      %s172 = sphi 0, %s169
      %s173 = sphi 0, %s172
      %s189 = sphi 0, %s173
    $region4: #{tpu_custom_call.1} parent=1 // loop_header_branch
      %21 = sbr.rel (%p19) target = $region8
    $region5: #{tpu_custom_call.1} parent=1 // loop_body
      %s23 = ssub.s32 %s18, 1
      %s24 = ssub.s32 %s18, 2
      %s31 = sadd.s32 1, %s26
      %p32 = scmp.ge.s32.totalorder %s31, 1
      %s33 = scalar_select %p32, 0, %s31
      %s34 = sadd.s32 1, %s25
      %s35 = scalar_select %p32, %s34, %s25
      %p36 = scmp.ge.s32.totalorder %s35, 2
      %s37 = scalar_select %p36, 0, %s35
      %s38 = ssub.s32 %s25, %s37
      %s39 = ssub.s32 %s26, %s33
      %s40 = sor.u32 %s38, %s39
      %p41 = scmp.eq.s32.totalorder %s40, 0
      %s43 = sadd.s32 %s42, 1
      %s44 = scalar_select %p41, %s42, %s43
      %p47 = pneg %p41
      %p48 = scmp.eq.s32.totalorder %s18, 1
      %p49 = por %p47, %p48
      %p50 = scmp.ne.s32.totalorder %s42, %s45
      %p51 = scmp.eq.s32.totalorder %s18, 0
      %p52 = por %p50, %p51
      %p53 = scmp.ne.s32.totalorder %s42, %s45
      %p54 = scmp.eq.s32.totalorder %s23, 1
      %p55 = por %p53, %p54
      %p56 = scmp.ne.s32.totalorder %s45, %s46
      %p57 = scmp.eq.s32.totalorder %s23, 0
      %p58 = por %p56, %p57
      %p59 = scmp.ne.s32.totalorder %s45, %s46
      %p60 = scmp.eq.s32.totalorder %s24, 1
      %p61 = por %p59, %p60
      %p63 = scmp.ne.s32.totalorder %s46, %s62
      %p64 = scmp.eq.s32.totalorder %s24, 0
      %p65 = por %p63, %p64
      %s66 = ssub.s32 %s25, %s37
      %s67 = ssub.s32 %s26, %s33
      %s68 = sor.u32 %s66, %s67
      %p69 = scmp.eq.s32.totalorder %s68, 0
      %s71 = sadd.s32 %s70, 1
      %s72 = scalar_select %p69, %s70, %s71
      %p75 = pneg %p69
      %p76 = scmp.eq.s32.totalorder %s18, 1
      %p77 = por %p75, %p76
      %p78 = scmp.ne.s32.totalorder %s70, %s73
      %p79 = scmp.eq.s32.totalorder %s18, 0
      %p80 = por %p78, %p79
      %p81 = scmp.ne.s32.totalorder %s70, %s73
      %p82 = scmp.eq.s32.totalorder %s23, 1
      %p83 = por %p81, %p82
      %p84 = scmp.ne.s32.totalorder %s73, %s74
      %p85 = scmp.eq.s32.totalorder %s23, 0
      %p86 = por %p84, %p85
      %p87 = scmp.ne.s32.totalorder %s73, %s74
      %p88 = scmp.eq.s32.totalorder %s24, 1
      %p89 = por %p87, %p88
      %p91 = scmp.ne.s32.totalorder %s74, %s90
      %p92 = scmp.eq.s32.totalorder %s24, 0
      %p93 = por %p91, %p92
      %s95 = sadd.s32 %s94, 1
      %p98 = scmp.eq.s32.totalorder %s18, 1
      %p99 = scmp.ne.s32.totalorder %s94, %s96
      %p100 = scmp.eq.s32.totalorder %s18, 0
      %p101 = por %p99, %p100
      %p102 = scmp.ne.s32.totalorder %s94, %s96
      %p103 = scmp.eq.s32.totalorder %s23, 1
      %p104 = por %p102, %p103
      %p105 = scmp.ne.s32.totalorder %s96, %s97
      %p106 = scmp.eq.s32.totalorder %s23, 0
      %p107 = por %p105, %p106
      %p108 = scmp.ne.s32.totalorder %s96, %s97
      %p109 = scmp.eq.s32.totalorder %s24, 1
      %p110 = por %p108, %p109
      %p112 = scmp.ne.s32.totalorder %s97, %s111
      %p113 = scmp.eq.s32.totalorder %s24, 0
      %p114 = por %p112, %p113
      %s115 = ssub.s32 %s25, %s37
      %p116 = scmp.eq.s32.totalorder %s115, 0
      %s118 = sadd.s32 %s117, 1
      %s119 = scalar_select %p116, %s117, %s118
      %p122 = pneg %p116
      %p123 = scmp.eq.s32.totalorder %s18, 1
      %p124 = por %p122, %p123
      %p125 = scmp.ne.s32.totalorder %s117, %s120
      %p126 = scmp.eq.s32.totalorder %s18, 0
      %p127 = por %p125, %p126
      %p128 = scmp.ne.s32.totalorder %s117, %s120
      %p129 = scmp.eq.s32.totalorder %s23, 1
      %p130 = por %p128, %p129
      %p131 = scmp.ne.s32.totalorder %s120, %s121
      %p132 = scmp.eq.s32.totalorder %s23, 0
      %p133 = por %p131, %p132
      %p134 = scmp.ne.s32.totalorder %s120, %s121
      %p135 = scmp.eq.s32.totalorder %s24, 1
      %p136 = por %p134, %p135
      %p138 = scmp.ne.s32.totalorder %s121, %s137
      %p139 = scmp.eq.s32.totalorder %s24, 0
      %p140 = por %p138, %p139
      %s141 = ssub.s32 %s25, %s37
      %p142 = scmp.eq.s32.totalorder %s141, 0
      %s144 = sadd.s32 %s143, 1
      %s145 = scalar_select %p142, %s143, %s144
      %p148 = pneg %p142
      %p149 = scmp.eq.s32.totalorder %s18, 1
      %p150 = por %p148, %p149
      %p151 = scmp.ne.s32.totalorder %s143, %s146
      %p152 = scmp.eq.s32.totalorder %s18, 0
      %p153 = por %p151, %p152
      %p154 = scmp.ne.s32.totalorder %s143, %s146
      %p155 = scmp.eq.s32.totalorder %s23, 1
      %p156 = por %p154, %p155
      %p157 = scmp.ne.s32.totalorder %s146, %s147
      %p158 = scmp.eq.s32.totalorder %s23, 0
      %p159 = por %p157, %p158
      %p160 = scmp.ne.s32.totalorder %s146, %s147
      %p161 = scmp.eq.s32.totalorder %s24, 1
      %p162 = por %p160, %p161
      %p164 = scmp.ne.s32.totalorder %s147, %s163
      %p165 = scmp.eq.s32.totalorder %s24, 0
      %p166 = por %p164, %p165
      %s167 = ssub.s32 %s25, %s37
      %p168 = scmp.eq.s32.totalorder %s167, 0
      %s170 = sadd.s32 %s169, 1
      %s171 = scalar_select %p168, %s169, %s170
      %p174 = pneg %p168
      %p175 = scmp.eq.s32.totalorder %s18, 1
      %p176 = por %p174, %p175
      %p177 = scmp.ne.s32.totalorder %s169, %s172
      %p178 = scmp.eq.s32.totalorder %s18, 0
      %p179 = por %p177, %p178
      %p180 = scmp.ne.s32.totalorder %s169, %s172
      %p181 = scmp.eq.s32.totalorder %s23, 1
      %p182 = por %p180, %p181
      %p183 = scmp.ne.s32.totalorder %s172, %s173
      %p184 = scmp.eq.s32.totalorder %s23, 0
      %p185 = por %p183, %p184
      %p186 = scmp.ne.s32.totalorder %s172, %s173
      %p187 = scmp.eq.s32.totalorder %s24, 1
      %p188 = por %p186, %p187
      %p190 = scmp.ne.s32.totalorder %s173, %s189
      %p191 = scmp.eq.s32.totalorder %s24, 0
      %p192 = por %p190, %p191
      %p193 = scmp.le.s32.totalorder 1, %s18
      %p194 = scmp.lt.s32.totalorder %s18, 3
      %p195 = pnand %p193, %p194
      %p196 = pneg %p195
      // Predicated region
      $region9: #{tpu_custom_call.1} parent=5 // pred_check
        _
      $region10: #{tpu_custom_call.1} parent=5 // pred_check_branch
        %198 = sbr.rel (%p195) target = $region12
      $region11: #{tpu_custom_call.1} parent=5 // pred_region
        %s199 = ssub.s32 %s18, 1
        // Predicated region
        $region13: #{tpu_custom_call.1} parent=11 // pred_check
          %p200 = pneg %p107
        $region14: #{tpu_custom_call.1} parent=11 // pred_check_branch
          %202 = sbr.rel (%p200) target = $region16
        $region15: #{tpu_custom_call.1} parent=11 // pred_region
          %s204 = ssub.s32 128, 128
          %205 = vsyncadd [#allocation5], %s204
          %s207 = sshll.u32 [#allocation6], 4
          %s208 = int_to_ptr.vmem [resolvable:$true] %s207
          %210 = dma.hbm_to_vmem [thread:$0]  %s2, 128, %s208, [#allocation5]
        $region16: #{tpu_custom_call.1} parent=11 // pred_fallthru
          _
      $region12: #{tpu_custom_call.1} parent=5 // pred_fallthru
        _
      %p211 = scmp.lt.s32.totalorder %s18, 2
      // Predicated region
      $region17: #{tpu_custom_call.1} parent=5 // pred_check
        %p212 = pneg %p211
      $region18: #{tpu_custom_call.1} parent=5 // pred_check_branch
        %214 = sbr.rel (%p212) target = $region20
      $region19: #{tpu_custom_call.1} parent=5 // pred_region
        // Predicated region
        $region21: #{tpu_custom_call.1} parent=19 // pred_check
          %p215 = pneg %p52
        $region22: #{tpu_custom_call.1} parent=19 // pred_check_branch
          %217 = sbr.rel (%p215) target = $region24
        $region23: #{tpu_custom_call.1} parent=19 // pred_region
          %s218 = sand.u32 %s42, 1
          %s219 = scalar_lea.sflag [#allocation3], %s218
          %s220 = sand.u32 %s42, 1
          %s221 = smul.addr %s220, 256
          %s222 = scalar_lea.vmem [#allocation2], %s221
          %s223 = smul.u32 32, %s26
          %s225 = ssub.s32 4096, 4096
          %226 = vsyncadd %s219, %s225
          %s227 = smul.addr %s25, 32
          %s228 = sadd.s32 %s223, %s227
          %s229 = smul.addr %s228, 128
          %s230 = scalar_lea.hbm %s0, %s229
          %s232 = sshll.u32 %s222, 4
          %s233 = int_to_ptr.vmem [resolvable:$true] %s232
          %235 = dma.hbm_to_vmem [thread:$0]  %s230, 4096, %s233, %s219
        $region24: #{tpu_custom_call.1} parent=19 // pred_fallthru
          _
        // Predicated region
        $region25: #{tpu_custom_call.1} parent=19 // pred_check
          %p236 = pneg %p80
        $region26: #{tpu_custom_call.1} parent=19 // pred_check_branch
          %238 = sbr.rel (%p236) target = $region28
        $region27: #{tpu_custom_call.1} parent=19 // pred_region
          %s239 = sand.u32 %s18, 1
          %s240 = scalar_lea.sflag [#allocation5], %s239
          %s241 = sand.u32 %s70, 1
          %s242 = smul.addr %s241, 256
          %s243 = scalar_lea.vmem [#allocation4], %s242
          %s244 = smul.u32 32, %s26
          %s246 = ssub.s32 4096, 4096
          %247 = vsyncadd %s240, %s246
          %s248 = smul.addr %s25, 32
          %s249 = sadd.s32 %s244, %s248
          %s250 = smul.addr %s249, 128
          %s251 = scalar_lea.hbm %s1, %s250
          %s253 = sshll.u32 %s243, 4
          %s254 = int_to_ptr.vmem [resolvable:$true] %s253
          %256 = dma.hbm_to_vmem [thread:$0]  %s251, 4096, %s254, %s240
        $region28: #{tpu_custom_call.1} parent=19 // pred_fallthru
          _
      $region20: #{tpu_custom_call.1} parent=5 // pred_fallthru
        _
      %p257 = scmp.le.s32.totalorder 1, %s18
      %p258 = scmp.lt.s32.totalorder %s18, 3
      %p259 = pnand %p257, %p258
      %p260 = pneg %p259
      // Predicated region
      $region29: #{tpu_custom_call.1} parent=5 // pred_check
        _
      $region30: #{tpu_custom_call.1} parent=5 // pred_check_branch
        %262 = sbr.rel (%p259) target = $region32
      $region31: #{tpu_custom_call.1} parent=5 // pred_region
        %s263 = ssub.s32 %s18, 1
        %s264 = sand.u32 %s45, 1
        %s265 = scalar_lea.sflag [#allocation3], %s264
        %s266 = sand.u32 %s45, 1
        %s267 = smul.addr %s266, 256
        %s268 = scalar_lea.vmem [#allocation2], %s267
        // Predicated region
        $region33: #{tpu_custom_call.1} parent=31 // pred_check
          %p269 = pneg %p58
        $region34: #{tpu_custom_call.1} parent=31 // pred_check_branch
          %271 = sbr.rel (%p269) target = $region36
        $region35: #{tpu_custom_call.1} parent=31 // pred_region
          %272 = dma.done %s265, 4096
        $region36: #{tpu_custom_call.1} parent=31 // pred_fallthru
          _
        %s273 = sand.u32 %s23, 1
        %s274 = scalar_lea.sflag [#allocation5], %s273
        %s275 = sand.u32 %s73, 1
        %s276 = smul.addr %s275, 256
        %s277 = scalar_lea.vmem [#allocation4], %s276
        // Predicated region
        $region37: #{tpu_custom_call.1} parent=31 // pred_check
          %p278 = pneg %p86
        $region38: #{tpu_custom_call.1} parent=31 // pred_check_branch
          %280 = sbr.rel (%p278) target = $region40
        $region39: #{tpu_custom_call.1} parent=31 // pred_region
          %281 = dma.done %s274, 4096
        $region40: #{tpu_custom_call.1} parent=31 // pred_fallthru
          _
        // Predicated region
        $region41: #{tpu_custom_call.1} parent=31 // pred_check
          %p282 = pneg %p107
        $region42: #{tpu_custom_call.1} parent=31 // pred_check_branch
          %284 = sbr.rel (%p282) target = $region44
        $region43: #{tpu_custom_call.1} parent=31 // pred_region
          %285 = dma.done [#allocation5], 128
        $region44: #{tpu_custom_call.1} parent=31 // pred_fallthru
          _
        %s286 = sand.u32 %s45, 1
        %s287 = scalar_lea.sflag [#allocation3], %s286
        %s288 = sand.u32 %s45, 1
        %s289 = smul.addr %s288, 256
        %s290 = scalar_lea.vmem [#allocation2], %s289
        %p291 = pneg %p58
        %p292 = pneg %p55
        %s293 = sand.u32 %s23, 1
        %s294 = scalar_lea.sflag [#allocation5], %s293
        %s295 = sand.u32 %s73, 1
        %s296 = smul.addr %s295, 256
        %s297 = scalar_lea.vmem [#allocation4], %s296
        %p298 = pneg %p86
        %p299 = pneg %p83
        %p300 = pneg %p107
        %p301 = pneg %p104
        %p302 = pneg %p133
        %p303 = pneg %p130
        %p304 = scmp.lt.s32.totalorder %s27, 1
        %s305 = scalar_select %p304, %s27, 1
        %s306 = smul.addr %s305, 8
        %s307 = scalar_lea.vmem %s3, %s306
        %p308 = pneg %p159
        %p309 = pneg %p156
        %p310 = scmp.lt.s32.totalorder %s27, 1
        %s311 = scalar_select %p310, %s27, 1
        %s312 = smul.addr %s311, 8
        %s313 = scalar_lea.vmem %s4, %s312
        %p314 = pneg %p185
        %p315 = pneg %p182
        %p316 = scmp.lt.s32.totalorder %s27, 1
        %s317 = scalar_select %p316, %s27, 1
        %s318 = smul.addr %s317, 8
        %s319 = scalar_lea.vmem %s5, %s318
        %s320 = smul.u32 32, %s28
        %s321 = smul.u32 32, %s28
        %p322 = scmp.lt.s32.totalorder %s27, 1
        %s323 = scalar_select %p322, %s27, 1
        %s324 = smul.addr %s323, 8
        %s325 = scalar_lea.vmem %s3, %s324
        %p326 = scmp.lt.s32.totalorder %s27, 1
        %s327 = scalar_select %p326, %s27, 1
        %s328 = smul.addr %s327, 8
        %s329 = scalar_lea.vmem %s4, %s328
        %p330 = scmp.lt.s32.totalorder %s27, 1
        %s331 = scalar_select %p330, %s27, 1
        %s332 = smul.addr %s331, 8
        %s333 = scalar_lea.vmem %s5, %s332
        %p334 = scmp.eq.s32.totalorder %s28, 0
        // Predicated region
        $region45: #{tpu_custom_call.1} parent=31 // pred_check
          %p335 = pneg %p334
        $region46: #{tpu_custom_call.1} parent=31 // pred_check_branch
          %337 = sbr.rel (%p335) target = $region48
        $region47: #{tpu_custom_call.1} parent=31 // pred_region
          %vm338 = vcmask 5120
          %339 = vst.msk [vmem:[%s325] sm:$0x3f] %vm338, 0.0
          %340 = vst.msk [vmem:[%s329] sm:$0x3f] %vm338, 0.0
          %vm341 = vcmask 7168
          %342 = vst.msk [vmem:[%s333] sm:$0xff] %vm341, 0.0
        $region48: #{tpu_custom_call.1} parent=31 // pred_fallthru
          _
        %v343 = vld [vmem:[%s268] sm:$0xff]
        %v344 = vld [vmem:[%s268 + $0x8] sm:$0xff]
        %v345 = vld [vmem:[%s268 + $0x10] sm:$0xff]
        %v346 = vld [vmem:[%s268 + $0x18] sm:$0xff]
        %v347 = vld [vmem:[%s268 + $0x20] sm:$0xff]
        %v348 = vld [vmem:[%s268 + $0x28] sm:$0xff]
        %v349 = vld [vmem:[%s268 + $0x30] sm:$0xff]
        %v350 = vld [vmem:[%s268 + $0x38] sm:$0xff]
        %v351 = vld [vmem:[%s268 + $0x40] sm:$0xff]
        %v352 = vld [vmem:[%s268 + $0x48] sm:$0xff]
        %v353 = vld [vmem:[%s268 + $0x50] sm:$0xff]
        %v354 = vld [vmem:[%s268 + $0x58] sm:$0xff]
        %v355 = vld [vmem:[%s268 + $0x60] sm:$0xff]
        %v356 = vld [vmem:[%s268 + $0x68] sm:$0xff]
        %v357 = vld [vmem:[%s268 + $0x70] sm:$0xff]
        %v358 = vld [vmem:[%s268 + $0x78] sm:$0xff]
        %v359 = vld [vmem:[%s268 + $0x80] sm:$0xff]
        %v360 = vld [vmem:[%s268 + $0x88] sm:$0xff]
        %v361 = vld [vmem:[%s268 + $0x90] sm:$0xff]
        %v362 = vld [vmem:[%s268 + $0x98] sm:$0xff]
        %v363 = vld [vmem:[%s268 + $0xa0] sm:$0xff]
        %v364 = vld [vmem:[%s268 + $0xa8] sm:$0xff]
        %v365 = vld [vmem:[%s268 + $0xb0] sm:$0xff]
        %v366 = vld [vmem:[%s268 + $0xb8] sm:$0xff]
        %v367 = vld [vmem:[%s268 + $0xc0] sm:$0xff]
        %v368 = vld [vmem:[%s268 + $0xc8] sm:$0xff]
        %v369 = vld [vmem:[%s268 + $0xd0] sm:$0xff]
        %v370 = vld [vmem:[%s268 + $0xd8] sm:$0xff]
        %v371 = vld [vmem:[%s268 + $0xe0] sm:$0xff]
        %v372 = vld [vmem:[%s268 + $0xe8] sm:$0xff]
        %v373 = vld [vmem:[%s268 + $0xf0] sm:$0xff]
        %v374 = vld [vmem:[%s268 + $0xf8] sm:$0xff]
        %v375 = vld [vmem:[%s277] sm:$0xff]
        %v376 = vld [vmem:[%s277 + $0x8] sm:$0xff]
        %v377 = vld [vmem:[%s277 + $0x10] sm:$0xff]
        %v378 = vld [vmem:[%s277 + $0x18] sm:$0xff]
        %v379 = vld [vmem:[%s277 + $0x20] sm:$0xff]
        %v380 = vld [vmem:[%s277 + $0x28] sm:$0xff]
        %v381 = vld [vmem:[%s277 + $0x30] sm:$0xff]
        %v382 = vld [vmem:[%s277 + $0x38] sm:$0xff]
        %v383 = vld [vmem:[%s277 + $0x40] sm:$0xff]
        %v384 = vld [vmem:[%s277 + $0x48] sm:$0xff]
        %v385 = vld [vmem:[%s277 + $0x50] sm:$0xff]
        %v386 = vld [vmem:[%s277 + $0x58] sm:$0xff]
        %v387 = vld [vmem:[%s277 + $0x60] sm:$0xff]
        %v388 = vld [vmem:[%s277 + $0x68] sm:$0xff]
        %v389 = vld [vmem:[%s277 + $0x70] sm:$0xff]
        %v390 = vld [vmem:[%s277 + $0x78] sm:$0xff]
        %v391 = vld [vmem:[%s277 + $0x80] sm:$0xff]
        %v392 = vld [vmem:[%s277 + $0x88] sm:$0xff]
        %v393 = vld [vmem:[%s277 + $0x90] sm:$0xff]
        %v394 = vld [vmem:[%s277 + $0x98] sm:$0xff]
        %v395 = vld [vmem:[%s277 + $0xa0] sm:$0xff]
        %v396 = vld [vmem:[%s277 + $0xa8] sm:$0xff]
        %v397 = vld [vmem:[%s277 + $0xb0] sm:$0xff]
        %v398 = vld [vmem:[%s277 + $0xb8] sm:$0xff]
        %v399 = vld [vmem:[%s277 + $0xc0] sm:$0xff]
        %v400 = vld [vmem:[%s277 + $0xc8] sm:$0xff]
        %v401 = vld [vmem:[%s277 + $0xd0] sm:$0xff]
        %v402 = vld [vmem:[%s277 + $0xd8] sm:$0xff]
        %v403 = vld [vmem:[%s277 + $0xe0] sm:$0xff]
        %v404 = vld [vmem:[%s277 + $0xe8] sm:$0xff]
        %v405 = vld [vmem:[%s277 + $0xf0] sm:$0xff]
        %v406 = vld [vmem:[%s277 + $0xf8] sm:$0xff]
        %v407 = vld [vmem:[#allocation6] sm:$0x3f]
        %vm408 = vcmask 64512
        %v410 = vsel %vm408, %v407, 0
        %412 = vmatprep.subr.mxu0 %v376
        %413 = vmatpush1.msra.mxu0 %v375
        %414 = vmatprep.subr.mxu0 0.0
        %415 = vmatpush1.msra.mxu0 0.0
        %416 = vmatprep.subr.mxu0 0.0
        %417 = vmatpush1.msra.mxu0 0.0
        %418 = vmatprep.subr.mxu0 0.0
        %419 = vmatpush1.msra.mxu0 0.0
        %420 = vmatprep.subr.mxu0 0.0
        %421 = vmatpush1.msra.mxu0 0.0
        %422 = vmatprep.subr.mxu0 0.0
        %423 = vmatpush1.msra.mxu0 0.0
        %424 = vmatprep.subr.mxu0 0.0
        %425 = vmatpush1.msra.mxu0 0.0
        %426 = vmatprep.subr.mxu0 0.0
        %427 = vmatpush1.msra.mxu0 0.0
        %428 = vmatprep.subr.mxu0 0.0
        %429 = vmatpush1.msra.mxu0 0.0
        %430 = vmatprep.subr.mxu0 0.0
        %431 = vmatpush1.msra.mxu0 0.0
        %432 = vmatprep.subr.mxu0 0.0
        %433 = vmatpush1.msra.mxu0 0.0
        %434 = vmatprep.subr.mxu0 0.0
        %435 = vmatpush1.msra.mxu0 0.0
        %436 = vmatprep.subr.mxu0 0.0
        %437 = vmatpush1.msra.mxu0 0.0
        %438 = vmatprep.subr.mxu0 0.0
        %439 = vmatpush1.msra.mxu0 0.0
        %440 = vmatprep.subr.mxu0 0.0
        %441 = vmatpush1.msra.mxu0 0.0
        %442 = vmatprep.subr.mxu0 0.0
        %443 = vmatpush1.msra.mxu0 0.0
        %444 = vmatprep.subr.mxu0 0.0
        %445 = vmatpush1.msra.mxu0 0.0
        %446 = vmatprep.subr.mxu0 0.0
        %447 = vmatpush1.msra.mxu0 0.0
        %448 = vmatprep.subr.mxu0 0.0
        %449 = vmatpush1.msra.mxu0 0.0
        %450 = vmatprep.subr.mxu0 0.0
        %451 = vmatpush1.msra.mxu0 0.0
        %452 = vmatprep.subr.mxu0 0.0
        %453 = vmatpush1.msra.mxu0 0.0
        %454 = vmatprep.subr.mxu0 0.0
        %455 = vmatpush1.msra.mxu0 0.0
        %456 = vmatprep.subr.mxu0 0.0
        %457 = vmatpush1.msra.mxu0 0.0
        %458 = vmatprep.subr.mxu0 0.0
        %459 = vmatpush1.msra.mxu0 0.0
        %460 = vmatprep.subr.mxu0 0.0
        %461 = vmatpush1.msra.mxu0 0.0
        %462 = vmatprep.subr.mxu0 0.0
        %463 = vmatpush1.msra.mxu0 0.0
        %464 = vmatprep.subr.mxu0 0.0
        %465 = vmatpush1.msra.mxu0 0.0
        %466 = vmatprep.subr.mxu0 0.0
        %467 = vmatpush1.msra.mxu0 0.0
        %468 = vmatprep.subr.mxu0 0.0
        %469 = vmatpush1.msra.mxu0 0.0
        %470 = vmatprep.subr.mxu0 0.0
        %471 = vmatpush1.msra.mxu0 0.0
        %472 = vmatprep.subr.mxu0 0.0
        %473 = vmatpush1.msra.mxu0 0.0
        %474 = vmatprep.subr.mxu0 0.0
        %475 = vmatpush1.msra.mxu0 0.0
        %476 = vmatprep.mubr.f32.mxu0 0.0
        %477 = vmatmul.mubr.f32.gmra.mrb[0].mxu0 %v410
        %v478 = vpop.f32.mrb[0].mxu0
        %v479 = vadd.f32 0.0, %v478
        %v480 = vpop.f32.mrb[0].mxu0
        %v481 = vadd.f32 0.0, %v480
        %482 = vdwg.mxu0
        %483 = vmatprep.subr.mxu0 %v378
        %484 = vmatpush1.msra.mxu0 %v377
        %485 = vmatprep.subr.mxu0 0.0
        %486 = vmatpush1.msra.mxu0 0.0
        %487 = vmatprep.subr.mxu0 0.0
        %488 = vmatpush1.msra.mxu0 0.0
        %489 = vmatprep.subr.mxu0 0.0
        %490 = vmatpush1.msra.mxu0 0.0
        %491 = vmatprep.subr.mxu0 0.0
        %492 = vmatpush1.msra.mxu0 0.0
        %493 = vmatprep.subr.mxu0 0.0
        %494 = vmatpush1.msra.mxu0 0.0
        %495 = vmatprep.subr.mxu0 0.0
        %496 = vmatpush1.msra.mxu0 0.0
        %497 = vmatprep.subr.mxu0 0.0
        %498 = vmatpush1.msra.mxu0 0.0
        %499 = vmatprep.subr.mxu0 0.0
        %500 = vmatpush1.msra.mxu0 0.0
        %501 = vmatprep.subr.mxu0 0.0
        %502 = vmatpush1.msra.mxu0 0.0
        %503 = vmatprep.subr.mxu0 0.0
        %504 = vmatpush1.msra.mxu0 0.0
        %505 = vmatprep.subr.mxu0 0.0
        %506 = vmatpush1.msra.mxu0 0.0
        %507 = vmatprep.subr.mxu0 0.0
        %508 = vmatpush1.msra.mxu0 0.0
        %509 = vmatprep.subr.mxu0 0.0
        %510 = vmatpush1.msra.mxu0 0.0
        %511 = vmatprep.subr.mxu0 0.0
        %512 = vmatpush1.msra.mxu0 0.0
        %513 = vmatprep.subr.mxu0 0.0
        %514 = vmatpush1.msra.mxu0 0.0
        %515 = vmatprep.subr.mxu0 0.0
        %516 = vmatpush1.msra.mxu0 0.0
        %517 = vmatprep.subr.mxu0 0.0
        %518 = vmatpush1.msra.mxu0 0.0
        %519 = vmatprep.subr.mxu0 0.0
        %520 = vmatpush1.msra.mxu0 0.0
        %521 = vmatprep.subr.mxu0 0.0
        %522 = vmatpush1.msra.mxu0 0.0
        %523 = vmatprep.subr.mxu0 0.0
        %524 = vmatpush1.msra.mxu0 0.0
        %525 = vmatprep.subr.mxu0 0.0
        %526 = vmatpush1.msra.mxu0 0.0
        %527 = vmatprep.subr.mxu0 0.0
        %528 = vmatpush1.msra.mxu0 0.0
        %529 = vmatprep.subr.mxu0 0.0
        %530 = vmatpush1.msra.mxu0 0.0
        %531 = vmatprep.subr.mxu0 0.0
        %532 = vmatpush1.msra.mxu0 0.0
        %533 = vmatprep.subr.mxu0 0.0
        %534 = vmatpush1.msra.mxu0 0.0
        %535 = vmatprep.subr.mxu0 0.0
        %536 = vmatpush1.msra.mxu0 0.0
        %537 = vmatprep.subr.mxu0 0.0
        %538 = vmatpush1.msra.mxu0 0.0
        %539 = vmatprep.subr.mxu0 0.0
        %540 = vmatpush1.msra.mxu0 0.0
        %541 = vmatprep.subr.mxu0 0.0
        %542 = vmatpush1.msra.mxu0 0.0
        %543 = vmatprep.subr.mxu0 0.0
        %544 = vmatpush1.msra.mxu0 0.0
        %545 = vmatprep.subr.mxu0 0.0
        %546 = vmatpush1.msra.mxu0 0.0
        %547 = vmatprep.mubr.f32.mxu0 0.0
        %548 = vmatmul.mubr.f32.gmra.mrb[0].mxu0 %v410
        %v549 = vpop.f32.mrb[0].mxu0
        %v550 = vadd.f32 0.0, %v549
        %v551 = vpop.f32.mrb[0].mxu0
        %v552 = vadd.f32 0.0, %v551
        %553 = vdwg.mxu0
        %554 = vmatprep.subr.mxu0 %v380
        %555 = vmatpush1.msra.mxu0 %v379
        %556 = vmatprep.subr.mxu0 0.0
        %557 = vmatpush1.msra.mxu0 0.0
        %558 = vmatprep.subr.mxu0 0.0
        %559 = vmatpush1.msra.mxu0 0.0
        %560 = vmatprep.subr.mxu0 0.0
        %561 = vmatpush1.msra.mxu0 0.0
        %562 = vmatprep.subr.mxu0 0.0
        %563 = vmatpush1.msra.mxu0 0.0
        %564 = vmatprep.subr.mxu0 0.0
        %565 = vmatpush1.msra.mxu0 0.0
        %566 = vmatprep.subr.mxu0 0.0
        %567 = vmatpush1.msra.mxu0 0.0
        %568 = vmatprep.subr.mxu0 0.0
        %569 = vmatpush1.msra.mxu0 0.0
        %570 = vmatprep.subr.mxu0 0.0
        %571 = vmatpush1.msra.mxu0 0.0
        %572 = vmatprep.subr.mxu0 0.0
        %573 = vmatpush1.msra.mxu0 0.0
        %574 = vmatprep.subr.mxu0 0.0
        %575 = vmatpush1.msra.mxu0 0.0
        %576 = vmatprep.subr.mxu0 0.0
        %577 = vmatpush1.msra.mxu0 0.0
        %578 = vmatprep.subr.mxu0 0.0
        %579 = vmatpush1.msra.mxu0 0.0
        %580 = vmatprep.subr.mxu0 0.0
        %581 = vmatpush1.msra.mxu0 0.0
        %582 = vmatprep.subr.mxu0 0.0
        %583 = vmatpush1.msra.mxu0 0.0
        %584 = vmatprep.subr.mxu0 0.0
        %585 = vmatpush1.msra.mxu0 0.0
        %586 = vmatprep.subr.mxu0 0.0
        %587 = vmatpush1.msra.mxu0 0.0
        %588 = vmatprep.subr.mxu0 0.0
        %589 = vmatpush1.msra.mxu0 0.0
        %590 = vmatprep.subr.mxu0 0.0
        %591 = vmatpush1.msra.mxu0 0.0
        %592 = vmatprep.subr.mxu0 0.0
        %593 = vmatpush1.msra.mxu0 0.0
        %594 = vmatprep.subr.mxu0 0.0
        %595 = vmatpush1.msra.mxu0 0.0
        %596 = vmatprep.subr.mxu0 0.0
        %597 = vmatpush1.msra.mxu0 0.0
        %598 = vmatprep.subr.mxu0 0.0
        %599 = vmatpush1.msra.mxu0 0.0
        %600 = vmatprep.subr.mxu0 0.0
        %601 = vmatpush1.msra.mxu0 0.0
        %602 = vmatprep.subr.mxu0 0.0
        %603 = vmatpush1.msra.mxu0 0.0
        %604 = vmatprep.subr.mxu0 0.0
        %605 = vmatpush1.msra.mxu0 0.0
        %606 = vmatprep.subr.mxu0 0.0
        %607 = vmatpush1.msra.mxu0 0.0
        %608 = vmatprep.subr.mxu0 0.0
        %609 = vmatpush1.msra.mxu0 0.0
        %610 = vmatprep.subr.mxu0 0.0
        %611 = vmatpush1.msra.mxu0 0.0
        %612 = vmatprep.subr.mxu0 0.0
        %613 = vmatpush1.msra.mxu0 0.0
        %614 = vmatprep.subr.mxu0 0.0
        %615 = vmatpush1.msra.mxu0 0.0
        %616 = vmatprep.subr.mxu0 0.0
        %617 = vmatpush1.msra.mxu0 0.0
        %618 = vmatprep.mubr.f32.mxu0 0.0
        %619 = vmatmul.mubr.f32.gmra.mrb[0].mxu0 %v410
        %v620 = vpop.f32.mrb[0].mxu0
        %v621 = vadd.f32 0.0, %v620
        %v622 = vpop.f32.mrb[0].mxu0
        %v623 = vadd.f32 0.0, %v622
        %624 = vdwg.mxu0
        %625 = vmatprep.subr.mxu0 %v382
        %626 = vmatpush1.msra.mxu0 %v381
        %627 = vmatprep.subr.mxu0 0.0
        %628 = vmatpush1.msra.mxu0 0.0
        %629 = vmatprep.subr.mxu0 0.0
        %630 = vmatpush1.msra.mxu0 0.0
        %631 = vmatprep.subr.mxu0 0.0
        %632 = vmatpush1.msra.mxu0 0.0
        %633 = vmatprep.subr.mxu0 0.0
        %634 = vmatpush1.msra.mxu0 0.0
        %635 = vmatprep.subr.mxu0 0.0
        %636 = vmatpush1.msra.mxu0 0.0
        %637 = vmatprep.subr.mxu0 0.0
        %638 = vmatpush1.msra.mxu0 0.0
        %639 = vmatprep.subr.mxu0 0.0
        %640 = vmatpush1.msra.mxu0 0.0
        %641 = vmatprep.subr.mxu0 0.0
        %642 = vmatpush1.msra.mxu0 0.0
        %643 = vmatprep.subr.mxu0 0.0
        %644 = vmatpush1.msra.mxu0 0.0
        %645 = vmatprep.subr.mxu0 0.0
        %646 = vmatpush1.msra.mxu0 0.0
        %647 = vmatprep.subr.mxu0 0.0
        %648 = vmatpush1.msra.mxu0 0.0
        %649 = vmatprep.subr.mxu0 0.0
        %650 = vmatpush1.msra.mxu0 0.0
        %651 = vmatprep.subr.mxu0 0.0
        %652 = vmatpush1.msra.mxu0 0.0
        %653 = vmatprep.subr.mxu0 0.0
        %654 = vmatpush1.msra.mxu0 0.0
        %655 = vmatprep.subr.mxu0 0.0
        %656 = vmatpush1.msra.mxu0 0.0
        %657 = vmatprep.subr.mxu0 0.0
        %658 = vmatpush1.msra.mxu0 0.0
        %659 = vmatprep.subr.mxu0 0.0
        %660 = vmatpush1.msra.mxu0 0.0
        %661 = vmatprep.subr.mxu0 0.0
        %662 = vmatpush1.msra.mxu0 0.0
        %663 = vmatprep.subr.mxu0 0.0
        %664 = vmatpush1.msra.mxu0 0.0
        %665 = vmatprep.subr.mxu0 0.0
        %666 = vmatpush1.msra.mxu0 0.0
        %667 = vmatprep.subr.mxu0 0.0
        %668 = vmatpush1.msra.mxu0 0.0
        %669 = vmatprep.subr.mxu0 0.0
        %670 = vmatpush1.msra.mxu0 0.0
        %671 = vmatprep.subr.mxu0 0.0
        %672 = vmatpush1.msra.mxu0 0.0
        %673 = vmatprep.subr.mxu0 0.0
        %674 = vmatpush1.msra.mxu0 0.0
        %675 = vmatprep.subr.mxu0 0.0
        %676 = vmatpush1.msra.mxu0 0.0
        %677 = vmatprep.subr.mxu0 0.0
        %678 = vmatpush1.msra.mxu0 0.0
        %679 = vmatprep.subr.mxu0 0.0
        %680 = vmatpush1.msra.mxu0 0.0
        %681 = vmatprep.subr.mxu0 0.0
        %682 = vmatpush1.msra.mxu0 0.0
        %683 = vmatprep.subr.mxu0 0.0
        %684 = vmatpush1.msra.mxu0 0.0
        %685 = vmatprep.subr.mxu0 0.0
        %686 = vmatpush1.msra.mxu0 0.0
        %687 = vmatprep.subr.mxu0 0.0
        %688 = vmatpush1.msra.mxu0 0.0
        %689 = vmatprep.mubr.f32.mxu0 0.0
        %690 = vmatmul.mubr.f32.gmra.mrb[0].mxu0 %v410
        %v691 = vpop.f32.mrb[0].mxu0
        %v692 = vadd.f32 0.0, %v691
        %v693 = vpop.f32.mrb[0].mxu0
        %v694 = vadd.f32 0.0, %v693
        %695 = vdwg.mxu0
        %696 = vmatprep.subr.mxu0 %v384
        %697 = vmatpush1.msra.mxu0 %v383
        %698 = vmatprep.subr.mxu0 0.0
        %699 = vmatpush1.msra.mxu0 0.0
        %700 = vmatprep.subr.mxu0 0.0
        %701 = vmatpush1.msra.mxu0 0.0
        %702 = vmatprep.subr.mxu0 0.0
        %703 = vmatpush1.msra.mxu0 0.0
        %704 = vmatprep.subr.mxu0 0.0
        %705 = vmatpush1.msra.mxu0 0.0
        %706 = vmatprep.subr.mxu0 0.0
        %707 = vmatpush1.msra.mxu0 0.0
        %708 = vmatprep.subr.mxu0 0.0
        %709 = vmatpush1.msra.mxu0 0.0
        %710 = vmatprep.subr.mxu0 0.0
        %711 = vmatpush1.msra.mxu0 0.0
        %712 = vmatprep.subr.mxu0 0.0
        %713 = vmatpush1.msra.mxu0 0.0
        %714 = vmatprep.subr.mxu0 0.0
        %715 = vmatpush1.msra.mxu0 0.0
        %716 = vmatprep.subr.mxu0 0.0
        %717 = vmatpush1.msra.mxu0 0.0
        %718 = vmatprep.subr.mxu0 0.0
        %719 = vmatpush1.msra.mxu0 0.0
        %720 = vmatprep.subr.mxu0 0.0
        %721 = vmatpush1.msra.mxu0 0.0
        %722 = vmatprep.subr.mxu0 0.0
        %723 = vmatpush1.msra.mxu0 0.0
        %724 = vmatprep.subr.mxu0 0.0
        %725 = vmatpush1.msra.mxu0 0.0
        %726 = vmatprep.subr.mxu0 0.0
        %727 = vmatpush1.msra.mxu0 0.0
        %728 = vmatprep.subr.mxu0 0.0
        %729 = vmatpush1.msra.mxu0 0.0
        %730 = vmatprep.subr.mxu0 0.0
        %731 = vmatpush1.msra.mxu0 0.0
        %732 = vmatprep.subr.mxu0 0.0
        %733 = vmatpush1.msra.mxu0 0.0
        %734 = vmatprep.subr.mxu0 0.0
        %735 = vmatpush1.msra.mxu0 0.0
        %736 = vmatprep.subr.mxu0 0.0
        %737 = vmatpush1.msra.mxu0 0.0
        %738 = vmatprep.subr.mxu0 0.0
        %739 = vmatpush1.msra.mxu0 0.0
        %740 = vmatprep.subr.mxu0 0.0
        %741 = vmatpush1.msra.mxu0 0.0
        %742 = vmatprep.subr.mxu0 0.0
        %743 = vmatpush1.msra.mxu0 0.0
        %744 = vmatprep.subr.mxu0 0.0
        %745 = vmatpush1.msra.mxu0 0.0
        %746 = vmatprep.subr.mxu0 0.0
        %747 = vmatpush1.msra.mxu0 0.0
        %748 = vmatprep.subr.mxu0 0.0
        %749 = vmatpush1.msra.mxu0 0.0
        %750 = vmatprep.subr.mxu0 0.0
        %751 = vmatpush1.msra.mxu0 0.0
        %752 = vmatprep.subr.mxu0 0.0
        %753 = vmatpush1.msra.mxu0 0.0
        %754 = vmatprep.subr.mxu0 0.0
        %755 = vmatpush1.msra.mxu0 0.0
        %756 = vmatprep.subr.mxu0 0.0
        %757 = vmatpush1.msra.mxu0 0.0
        %758 = vmatprep.subr.mxu0 0.0
        %759 = vmatpush1.msra.mxu0 0.0
        %760 = vmatprep.mubr.f32.mxu0 0.0
        %761 = vmatmul.mubr.f32.gmra.mrb[0].mxu0 %v410
        %v762 = vpop.f32.mrb[0].mxu0
        %v763 = vadd.f32 0.0, %v762
        %v764 = vpop.f32.mrb[0].mxu0
        %v765 = vadd.f32 0.0, %v764
        %766 = vdwg.mxu0
        %767 = vmatprep.subr.mxu0 %v386
        %768 = vmatpush1.msra.mxu0 %v385
        %769 = vmatprep.subr.mxu0 0.0
        %770 = vmatpush1.msra.mxu0 0.0
        %771 = vmatprep.subr.mxu0 0.0
        %772 = vmatpush1.msra.mxu0 0.0
        %773 = vmatprep.subr.mxu0 0.0
        %774 = vmatpush1.msra.mxu0 0.0
        %775 = vmatprep.subr.mxu0 0.0
        %776 = vmatpush1.msra.mxu0 0.0
        %777 = vmatprep.subr.mxu0 0.0
        %778 = vmatpush1.msra.mxu0 0.0
        %779 = vmatprep.subr.mxu0 0.0
        %780 = vmatpush1.msra.mxu0 0.0
        %781 = vmatprep.subr.mxu0 0.0
        %782 = vmatpush1.msra.mxu0 0.0
        %783 = vmatprep.subr.mxu0 0.0
        %784 = vmatpush1.msra.mxu0 0.0
        %785 = vmatprep.subr.mxu0 0.0
        %786 = vmatpush1.msra.mxu0 0.0
        %787 = vmatprep.subr.mxu0 0.0
        %788 = vmatpush1.msra.mxu0 0.0
        %789 = vmatprep.subr.mxu0 0.0
        %790 = vmatpush1.msra.mxu0 0.0
        %791 = vmatprep.subr.mxu0 0.0
        %792 = vmatpush1.msra.mxu0 0.0
        %793 = vmatprep.subr.mxu0 0.0
        %794 = vmatpush1.msra.mxu0 0.0
        %795 = vmatprep.subr.mxu0 0.0
        %796 = vmatpush1.msra.mxu0 0.0
        %797 = vmatprep.subr.mxu0 0.0
        %798 = vmatpush1.msra.mxu0 0.0
        %799 = vmatprep.subr.mxu0 0.0
        %800 = vmatpush1.msra.mxu0 0.0
        %801 = vmatprep.subr.mxu0 0.0
        %802 = vmatpush1.msra.mxu0 0.0
        %803 = vmatprep.subr.mxu0 0.0
        %804 = vmatpush1.msra.mxu0 0.0
        %805 = vmatprep.subr.mxu0 0.0
        %806 = vmatpush1.msra.mxu0 0.0
        %807 = vmatprep.subr.mxu0 0.0
        %808 = vmatpush1.msra.mxu0 0.0
        %809 = vmatprep.subr.mxu0 0.0
        %810 = vmatpush1.msra.mxu0 0.0
        %811 = vmatprep.subr.mxu0 0.0
        %812 = vmatpush1.msra.mxu0 0.0
        %813 = vmatprep.subr.mxu0 0.0
        %814 = vmatpush1.msra.mxu0 0.0
        %815 = vmatprep.subr.mxu0 0.0
        %816 = vmatpush1.msra.mxu0 0.0
        %817 = vmatprep.subr.mxu0 0.0
        %818 = vmatpush1.msra.mxu0 0.0
        %819 = vmatprep.subr.mxu0 0.0
        %820 = vmatpush1.msra.mxu0 0.0
        %821 = vmatprep.subr.mxu0 0.0
        %822 = vmatpush1.msra.mxu0 0.0
        %823 = vmatprep.subr.mxu0 0.0
        %824 = vmatpush1.msra.mxu0 0.0
        %825 = vmatprep.subr.mxu0 0.0
        %826 = vmatpush1.msra.mxu0 0.0
        %827 = vmatprep.subr.mxu0 0.0
        %828 = vmatpush1.msra.mxu0 0.0
        %829 = vmatprep.subr.mxu0 0.0
        %830 = vmatpush1.msra.mxu0 0.0
        %831 = vmatprep.mubr.f32.mxu0 0.0
        %832 = vmatmul.mubr.f32.gmra.mrb[0].mxu0 %v410
        %v833 = vpop.f32.mrb[0].mxu0
        %v834 = vadd.f32 0.0, %v833
        %v835 = vpop.f32.mrb[0].mxu0
        %v836 = vadd.f32 0.0, %v835
        %837 = vdwg.mxu0
        %838 = vmatprep.subr.mxu0 %v388
        %839 = vmatpush1.msra.mxu0 %v387
        %840 = vmatprep.subr.mxu0 0.0
        %841 = vmatpush1.msra.mxu0 0.0
        %842 = vmatprep.subr.mxu0 0.0
        %843 = vmatpush1.msra.mxu0 0.0
        %844 = vmatprep.subr.mxu0 0.0
        %845 = vmatpush1.msra.mxu0 0.0
        %846 = vmatprep.subr.mxu0 0.0
        %847 = vmatpush1.msra.mxu0 0.0
        %848 = vmatprep.subr.mxu0 0.0
        %849 = vmatpush1.msra.mxu0 0.0
        %850 = vmatprep.subr.mxu0 0.0
        %851 = vmatpush1.msra.mxu0 0.0
        %852 = vmatprep.subr.mxu0 0.0
        %853 = vmatpush1.msra.mxu0 0.0
        %854 = vmatprep.subr.mxu0 0.0
        %855 = vmatpush1.msra.mxu0 0.0
        %856 = vmatprep.subr.mxu0 0.0
        %857 = vmatpush1.msra.mxu0 0.0
        %858 = vmatprep.subr.mxu0 0.0
        %859 = vmatpush1.msra.mxu0 0.0
        %860 = vmatprep.subr.mxu0 0.0
        %861 = vmatpush1.msra.mxu0 0.0
        %862 = vmatprep.subr.mxu0 0.0
        %863 = vmatpush1.msra.mxu0 0.0
        %864 = vmatprep.subr.mxu0 0.0
        %865 = vmatpush1.msra.mxu0 0.0
        %866 = vmatprep.subr.mxu0 0.0
        %867 = vmatpush1.msra.mxu0 0.0
        %868 = vmatprep.subr.mxu0 0.0
        %869 = vmatpush1.msra.mxu0 0.0
        %870 = vmatprep.subr.mxu0 0.0
        %871 = vmatpush1.msra.mxu0 0.0
        %872 = vmatprep.subr.mxu0 0.0
        %873 = vmatpush1.msra.mxu0 0.0
        %874 = vmatprep.subr.mxu0 0.0
        %875 = vmatpush1.msra.mxu0 0.0
        %876 = vmatprep.subr.mxu0 0.0
        %877 = vmatpush1.msra.mxu0 0.0
        %878 = vmatprep.subr.mxu0 0.0
        %879 = vmatpush1.msra.mxu0 0.0
        %880 = vmatprep.subr.mxu0 0.0
        %881 = vmatpush1.msra.mxu0 0.0
        %882 = vmatprep.subr.mxu0 0.0
        %883 = vmatpush1.msra.mxu0 0.0
        %884 = vmatprep.subr.mxu0 0.0
        %885 = vmatpush1.msra.mxu0 0.0
        %886 = vmatprep.subr.mxu0 0.0
        %887 = vmatpush1.msra.mxu0 0.0
        %888 = vmatprep.subr.mxu0 0.0
        %889 = vmatpush1.msra.mxu0 0.0
        %890 = vmatprep.subr.mxu0 0.0
        %891 = vmatpush1.msra.mxu0 0.0
        %892 = vmatprep.subr.mxu0 0.0
        %893 = vmatpush1.msra.mxu0 0.0
        %894 = vmatprep.subr.mxu0 0.0
        %895 = vmatpush1.msra.mxu0 0.0
        %896 = vmatprep.subr.mxu0 0.0
        %897 = vmatpush1.msra.mxu0 0.0
        %898 = vmatprep.subr.mxu0 0.0
        %899 = vmatpush1.msra.mxu0 0.0
        %900 = vmatprep.subr.mxu0 0.0
        %901 = vmatpush1.msra.mxu0 0.0
        %902 = vmatprep.mubr.f32.mxu0 0.0
        %903 = vmatmul.mubr.f32.gmra.mrb[0].mxu0 %v410
        %v904 = vpop.f32.mrb[0].mxu0
        %v905 = vadd.f32 0.0, %v904
        %v906 = vpop.f32.mrb[0].mxu0
        %v907 = vadd.f32 0.0, %v906
        %908 = vdwg.mxu0
        %909 = vmatprep.subr.mxu0 %v390
        %910 = vmatpush1.msra.mxu0 %v389
        %911 = vmatprep.subr.mxu0 0.0
        %912 = vmatpush1.msra.mxu0 0.0
        %913 = vmatprep.subr.mxu0 0.0
        %914 = vmatpush1.msra.mxu0 0.0
        %915 = vmatprep.subr.mxu0 0.0
        %916 = vmatpush1.msra.mxu0 0.0
        %917 = vmatprep.subr.mxu0 0.0
        %918 = vmatpush1.msra.mxu0 0.0
        %919 = vmatprep.subr.mxu0 0.0
        %920 = vmatpush1.msra.mxu0 0.0
        %921 = vmatprep.subr.mxu0 0.0
        %922 = vmatpush1.msra.mxu0 0.0
        %923 = vmatprep.subr.mxu0 0.0
        %924 = vmatpush1.msra.mxu0 0.0
        %925 = vmatprep.subr.mxu0 0.0
        %926 = vmatpush1.msra.mxu0 0.0
        %927 = vmatprep.subr.mxu0 0.0
        %928 = vmatpush1.msra.mxu0 0.0
        %929 = vmatprep.subr.mxu0 0.0
        %930 = vmatpush1.msra.mxu0 0.0
        %931 = vmatprep.subr.mxu0 0.0
        %932 = vmatpush1.msra.mxu0 0.0
        %933 = vmatprep.subr.mxu0 0.0
        %934 = vmatpush1.msra.mxu0 0.0
        %935 = vmatprep.subr.mxu0 0.0
        %936 = vmatpush1.msra.mxu0 0.0
        %937 = vmatprep.subr.mxu0 0.0
        %938 = vmatpush1.msra.mxu0 0.0
        %939 = vmatprep.subr.mxu0 0.0
        %940 = vmatpush1.msra.mxu0 0.0
        %941 = vmatprep.subr.mxu0 0.0
        %942 = vmatpush1.msra.mxu0 0.0
        %943 = vmatprep.subr.mxu0 0.0
        %944 = vmatpush1.msra.mxu0 0.0
        %945 = vmatprep.subr.mxu0 0.0
        %946 = vmatpush1.msra.mxu0 0.0
        %947 = vmatprep.subr.mxu0 0.0
        %948 = vmatpush1.msra.mxu0 0.0
        %949 = vmatprep.subr.mxu0 0.0
        %950 = vmatpush1.msra.mxu0 0.0
        %951 = vmatprep.subr.mxu0 0.0
        %952 = vmatpush1.msra.mxu0 0.0
        %953 = vmatprep.subr.mxu0 0.0
        %954 = vmatpush1.msra.mxu0 0.0
        %955 = vmatprep.subr.mxu0 0.0
        %956 = vmatpush1.msra.mxu0 0.0
        %957 = vmatprep.subr.mxu0 0.0
        %958 = vmatpush1.msra.mxu0 0.0
        %959 = vmatprep.subr.mxu0 0.0
        %960 = vmatpush1.msra.mxu0 0.0
        %961 = vmatprep.subr.mxu0 0.0
        %962 = vmatpush1.msra.mxu0 0.0
        %963 = vmatprep.subr.mxu0 0.0
        %964 = vmatpush1.msra.mxu0 0.0
        %965 = vmatprep.subr.mxu0 0.0
        %966 = vmatpush1.msra.mxu0 0.0
        %967 = vmatprep.subr.mxu0 0.0
        %968 = vmatpush1.msra.mxu0 0.0
        %969 = vmatprep.subr.mxu0 0.0
        %970 = vmatpush1.msra.mxu0 0.0
        %971 = vmatprep.subr.mxu0 0.0
        %972 = vmatpush1.msra.mxu0 0.0
        %973 = vmatprep.mubr.f32.mxu0 0.0
        %974 = vmatmul.mubr.f32.gmra.mrb[0].mxu0 %v410
        %v975 = vpop.f32.mrb[0].mxu0
        %v976 = vadd.f32 0.0, %v975
        %v977 = vpop.f32.mrb[0].mxu0
        %v978 = vadd.f32 0.0, %v977
        %979 = vdwg.mxu0
        %980 = vmatprep.subr.mxu0 %v392
        %981 = vmatpush1.msra.mxu0 %v391
        %982 = vmatprep.subr.mxu0 0.0
        %983 = vmatpush1.msra.mxu0 0.0
        %984 = vmatprep.subr.mxu0 0.0
        %985 = vmatpush1.msra.mxu0 0.0
        %986 = vmatprep.subr.mxu0 0.0
        %987 = vmatpush1.msra.mxu0 0.0
        %988 = vmatprep.subr.mxu0 0.0
        %989 = vmatpush1.msra.mxu0 0.0
        %990 = vmatprep.subr.mxu0 0.0
        %991 = vmatpush1.msra.mxu0 0.0
        %992 = vmatprep.subr.mxu0 0.0
        %993 = vmatpush1.msra.mxu0 0.0
        %994 = vmatprep.subr.mxu0 0.0
        %995 = vmatpush1.msra.mxu0 0.0
        %996 = vmatprep.subr.mxu0 0.0
        %997 = vmatpush1.msra.mxu0 0.0
        %998 = vmatprep.subr.mxu0 0.0
        %999 = vmatpush1.msra.mxu0 0.0
        %1000 = vmatprep.subr.mxu0 0.0
        %1001 = vmatpush1.msra.mxu0 0.0
        %1002 = vmatprep.subr.mxu0 0.0
        %1003 = vmatpush1.msra.mxu0 0.0
        %1004 = vmatprep.subr.mxu0 0.0
        %1005 = vmatpush1.msra.mxu0 0.0
        %1006 = vmatprep.subr.mxu0 0.0
        %1007 = vmatpush1.msra.mxu0 0.0
        %1008 = vmatprep.subr.mxu0 0.0
        %1009 = vmatpush1.msra.mxu0 0.0
        %1010 = vmatprep.subr.mxu0 0.0
        %1011 = vmatpush1.msra.mxu0 0.0
        %1012 = vmatprep.subr.mxu0 0.0
        %1013 = vmatpush1.msra.mxu0 0.0
        %1014 = vmatprep.subr.mxu0 0.0
        %1015 = vmatpush1.msra.mxu0 0.0
        %1016 = vmatprep.subr.mxu0 0.0
        %1017 = vmatpush1.msra.mxu0 0.0
        %1018 = vmatprep.subr.mxu0 0.0
        %1019 = vmatpush1.msra.mxu0 0.0
        %1020 = vmatprep.subr.mxu0 0.0
        %1021 = vmatpush1.msra.mxu0 0.0
        %1022 = vmatprep.subr.mxu0 0.0
        %1023 = vmatpush1.msra.mxu0 0.0
        %1024 = vmatprep.subr.mxu0 0.0
        %1025 = vmatpush1.msra.mxu0 0.0
        %1026 = vmatprep.subr.mxu0 0.0
        %1027 = vmatpush1.msra.mxu0 0.0
        %1028 = vmatprep.subr.mxu0 0.0
        %1029 = vmatpush1.msra.mxu0 0.0
        %1030 = vmatprep.subr.mxu0 0.0
        %1031 = vmatpush1.msra.mxu0 0.0
        %1032 = vmatprep.subr.mxu0 0.0
        %1033 = vmatpush1.msra.mxu0 0.0
        %1034 = vmatprep.subr.mxu0 0.0
        %1035 = vmatpush1.msra.mxu0 0.0
        %1036 = vmatprep.subr.mxu0 0.0
        %1037 = vmatpush1.msra.mxu0 0.0
        %1038 = vmatprep.subr.mxu0 0.0
        %1039 = vmatpush1.msra.mxu0 0.0
        %1040 = vmatprep.subr.mxu0 0.0
        %1041 = vmatpush1.msra.mxu0 0.0
        %1042 = vmatprep.subr.mxu0 0.0
        %1043 = vmatpush1.msra.mxu0 0.0
        %1044 = vmatprep.mubr.f32.mxu0 0.0
        %1045 = vmatmul.mubr.f32.gmra.mrb[0].mxu0 %v410
        %v1046 = vpop.f32.mrb[0].mxu0
        %v1047 = vadd.f32 0.0, %v1046
        %v1048 = vpop.f32.mrb[0].mxu0
        %v1049 = vadd.f32 0.0, %v1048
        %1050 = vdwg.mxu0
        %1051 = vmatprep.subr.mxu0 %v394
        %1052 = vmatpush1.msra.mxu0 %v393
        %1053 = vmatprep.subr.mxu0 0.0
        %1054 = vmatpush1.msra.mxu0 0.0
        %1055 = vmatprep.subr.mxu0 0.0
        %1056 = vmatpush1.msra.mxu0 0.0
        %1057 = vmatprep.subr.mxu0 0.0
        %1058 = vmatpush1.msra.mxu0 0.0
        %1059 = vmatprep.subr.mxu0 0.0
        %1060 = vmatpush1.msra.mxu0 0.0
        %1061 = vmatprep.subr.mxu0 0.0
        %1062 = vmatpush1.msra.mxu0 0.0
        %1063 = vmatprep.subr.mxu0 0.0
        %1064 = vmatpush1.msra.mxu0 0.0
        %1065 = vmatprep.subr.mxu0 0.0
        %1066 = vmatpush1.msra.mxu0 0.0
        %1067 = vmatprep.subr.mxu0 0.0
        %1068 = vmatpush1.msra.mxu0 0.0
        %1069 = vmatprep.subr.mxu0 0.0
        %1070 = vmatpush1.msra.mxu0 0.0
        %1071 = vmatprep.subr.mxu0 0.0
        %1072 = vmatpush1.msra.mxu0 0.0
        %1073 = vmatprep.subr.mxu0 0.0
        %1074 = vmatpush1.msra.mxu0 0.0
        %1075 = vmatprep.subr.mxu0 0.0
        %1076 = vmatpush1.msra.mxu0 0.0
        %1077 = vmatprep.subr.mxu0 0.0
        %1078 = vmatpush1.msra.mxu0 0.0
        %1079 = vmatprep.subr.mxu0 0.0
        %1080 = vmatpush1.msra.mxu0 0.0
        %1081 = vmatprep.subr.mxu0 0.0
        %1082 = vmatpush1.msra.mxu0 0.0
        %1083 = vmatprep.subr.mxu0 0.0
        %1084 = vmatpush1.msra.mxu0 0.0
        %1085 = vmatprep.subr.mxu0 0.0
        %1086 = vmatpush1.msra.mxu0 0.0
        %1087 = vmatprep.subr.mxu0 0.0
        %1088 = vmatpush1.msra.mxu0 0.0
        %1089 = vmatprep.subr.mxu0 0.0
        %1090 = vmatpush1.msra.mxu0 0.0
        %1091 = vmatprep.subr.mxu0 0.0
        %1092 = vmatpush1.msra.mxu0 0.0
        %1093 = vmatprep.subr.mxu0 0.0
        %1094 = vmatpush1.msra.mxu0 0.0
        %1095 = vmatprep.subr.mxu0 0.0
        %1096 = vmatpush1.msra.mxu0 0.0
        %1097 = vmatprep.subr.mxu0 0.0
        %1098 = vmatpush1.msra.mxu0 0.0
        %1099 = vmatprep.subr.mxu0 0.0
        %1100 = vmatpush1.msra.mxu0 0.0
        %1101 = vmatprep.subr.mxu0 0.0
        %1102 = vmatpush1.msra.mxu0 0.0
        %1103 = vmatprep.subr.mxu0 0.0
        %1104 = vmatpush1.msra.mxu0 0.0
        %1105 = vmatprep.subr.mxu0 0.0
        %1106 = vmatpush1.msra.mxu0 0.0
        %1107 = vmatprep.subr.mxu0 0.0
        %1108 = vmatpush1.msra.mxu0 0.0
        %1109 = vmatprep.subr.mxu0 0.0
        %1110 = vmatpush1.msra.mxu0 0.0
        %1111 = vmatprep.subr.mxu0 0.0
        %1112 = vmatpush1.msra.mxu0 0.0
        %1113 = vmatprep.subr.mxu0 0.0
        %1114 = vmatpush1.msra.mxu0 0.0
        %1115 = vmatprep.mubr.f32.mxu0 0.0
        %1116 = vmatmul.mubr.f32.gmra.mrb[0].mxu0 %v410
        %v1117 = vpop.f32.mrb[0].mxu0
        %v1118 = vadd.f32 0.0, %v1117
        %v1119 = vpop.f32.mrb[0].mxu0
        %v1120 = vadd.f32 0.0, %v1119
        %1121 = vdwg.mxu0
        %1122 = vmatprep.subr.mxu0 %v396
        %1123 = vmatpush1.msra.mxu0 %v395
        %1124 = vmatprep.subr.mxu0 0.0
        %1125 = vmatpush1.msra.mxu0 0.0
        %1126 = vmatprep.subr.mxu0 0.0
        %1127 = vmatpush1.msra.mxu0 0.0
        %1128 = vmatprep.subr.mxu0 0.0
        %1129 = vmatpush1.msra.mxu0 0.0
        %1130 = vmatprep.subr.mxu0 0.0
        %1131 = vmatpush1.msra.mxu0 0.0
        %1132 = vmatprep.subr.mxu0 0.0
        %1133 = vmatpush1.msra.mxu0 0.0
        %1134 = vmatprep.subr.mxu0 0.0
        %1135 = vmatpush1.msra.mxu0 0.0
        %1136 = vmatprep.subr.mxu0 0.0
        %1137 = vmatpush1.msra.mxu0 0.0
        %1138 = vmatprep.subr.mxu0 0.0
        %1139 = vmatpush1.msra.mxu0 0.0
        %1140 = vmatprep.subr.mxu0 0.0
        %1141 = vmatpush1.msra.mxu0 0.0
        %1142 = vmatprep.subr.mxu0 0.0
        %1143 = vmatpush1.msra.mxu0 0.0
        %1144 = vmatprep.subr.mxu0 0.0
        %1145 = vmatpush1.msra.mxu0 0.0
        %1146 = vmatprep.subr.mxu0 0.0
        %1147 = vmatpush1.msra.mxu0 0.0
        %1148 = vmatprep.subr.mxu0 0.0
        %1149 = vmatpush1.msra.mxu0 0.0
        %1150 = vmatprep.subr.mxu0 0.0
        %1151 = vmatpush1.msra.mxu0 0.0
        %1152 = vmatprep.subr.mxu0 0.0
        %1153 = vmatpush1.msra.mxu0 0.0
        %1154 = vmatprep.subr.mxu0 0.0
        %1155 = vmatpush1.msra.mxu0 0.0
        %1156 = vmatprep.subr.mxu0 0.0
        %1157 = vmatpush1.msra.mxu0 0.0
        %1158 = vmatprep.subr.mxu0 0.0
        %1159 = vmatpush1.msra.mxu0 0.0
        %1160 = vmatprep.subr.mxu0 0.0
        %1161 = vmatpush1.msra.mxu0 0.0
        %1162 = vmatprep.subr.mxu0 0.0
        %1163 = vmatpush1.msra.mxu0 0.0
        %1164 = vmatprep.subr.mxu0 0.0
        %1165 = vmatpush1.msra.mxu0 0.0
        %1166 = vmatprep.subr.mxu0 0.0
        %1167 = vmatpush1.msra.mxu0 0.0
        %1168 = vmatprep.subr.mxu0 0.0
        %1169 = vmatpush1.msra.mxu0 0.0
        %1170 = vmatprep.subr.mxu0 0.0
        %1171 = vmatpush1.msra.mxu0 0.0
        %1172 = vmatprep.subr.mxu0 0.0
        %1173 = vmatpush1.msra.mxu0 0.0
        %1174 = vmatprep.subr.mxu0 0.0
        %1175 = vmatpush1.msra.mxu0 0.0
        %1176 = vmatprep.subr.mxu0 0.0
        %1177 = vmatpush1.msra.mxu0 0.0
        %1178 = vmatprep.subr.mxu0 0.0
        %1179 = vmatpush1.msra.mxu0 0.0
        %1180 = vmatprep.subr.mxu0 0.0
        %1181 = vmatpush1.msra.mxu0 0.0
        %1182 = vmatprep.subr.mxu0 0.0
        %1183 = vmatpush1.msra.mxu0 0.0
        %1184 = vmatprep.subr.mxu0 0.0
        %1185 = vmatpush1.msra.mxu0 0.0
        %1186 = vmatprep.mubr.f32.mxu0 0.0
        %1187 = vmatmul.mubr.f32.gmra.mrb[0].mxu0 %v410
        %v1188 = vpop.f32.mrb[0].mxu0
        %v1189 = vadd.f32 0.0, %v1188
        %v1190 = vpop.f32.mrb[0].mxu0
        %v1191 = vadd.f32 0.0, %v1190
        %1192 = vdwg.mxu0
        %1193 = vmatprep.subr.mxu0 %v398
        %1194 = vmatpush1.msra.mxu0 %v397
        %1195 = vmatprep.subr.mxu0 0.0
        %1196 = vmatpush1.msra.mxu0 0.0
        %1197 = vmatprep.subr.mxu0 0.0
        %1198 = vmatpush1.msra.mxu0 0.0
        %1199 = vmatprep.subr.mxu0 0.0
        %1200 = vmatpush1.msra.mxu0 0.0
        %1201 = vmatprep.subr.mxu0 0.0
        %1202 = vmatpush1.msra.mxu0 0.0
        %1203 = vmatprep.subr.mxu0 0.0
        %1204 = vmatpush1.msra.mxu0 0.0
        %1205 = vmatprep.subr.mxu0 0.0
        %1206 = vmatpush1.msra.mxu0 0.0
        %1207 = vmatprep.subr.mxu0 0.0
        %1208 = vmatpush1.msra.mxu0 0.0
        %1209 = vmatprep.subr.mxu0 0.0
        %1210 = vmatpush1.msra.mxu0 0.0
        %1211 = vmatprep.subr.mxu0 0.0
        %1212 = vmatpush1.msra.mxu0 0.0
        %1213 = vmatprep.subr.mxu0 0.0
        %1214 = vmatpush1.msra.mxu0 0.0
        %1215 = vmatprep.subr.mxu0 0.0
        %1216 = vmatpush1.msra.mxu0 0.0
        %1217 = vmatprep.subr.mxu0 0.0
        %1218 = vmatpush1.msra.mxu0 0.0
        %1219 = vmatprep.subr.mxu0 0.0
        %1220 = vmatpush1.msra.mxu0 0.0
        %1221 = vmatprep.subr.mxu0 0.0
        %1222 = vmatpush1.msra.mxu0 0.0
        %1223 = vmatprep.subr.mxu0 0.0
        %1224 = vmatpush1.msra.mxu0 0.0
        %1225 = vmatprep.subr.mxu0 0.0
        %1226 = vmatpush1.msra.mxu0 0.0
        %1227 = vmatprep.subr.mxu0 0.0
        %1228 = vmatpush1.msra.mxu0 0.0
        %1229 = vmatprep.subr.mxu0 0.0
        %1230 = vmatpush1.msra.mxu0 0.0
        %1231 = vmatprep.subr.mxu0 0.0
        %1232 = vmatpush1.msra.mxu0 0.0
        %1233 = vmatprep.subr.mxu0 0.0
        %1234 = vmatpush1.msra.mxu0 0.0
        %1235 = vmatprep.subr.mxu0 0.0
        %1236 = vmatpush1.msra.mxu0 0.0
        %1237 = vmatprep.subr.mxu0 0.0
        %1238 = vmatpush1.msra.mxu0 0.0
        %1239 = vmatprep.subr.mxu0 0.0
        %1240 = vmatpush1.msra.mxu0 0.0
        %1241 = vmatprep.subr.mxu0 0.0
        %1242 = vmatpush1.msra.mxu0 0.0
        %1243 = vmatprep.subr.mxu0 0.0
        %1244 = vmatpush1.msra.mxu0 0.0
        %1245 = vmatprep.subr.mxu0 0.0
        %1246 = vmatpush1.msra.mxu0 0.0
        %1247 = vmatprep.subr.mxu0 0.0
        %1248 = vmatpush1.msra.mxu0 0.0
        %1249 = vmatprep.subr.mxu0 0.0
        %1250 = vmatpush1.msra.mxu0 0.0
        %1251 = vmatprep.subr.mxu0 0.0
        %1252 = vmatpush1.msra.mxu0 0.0
        %1253 = vmatprep.subr.mxu0 0.0
        %1254 = vmatpush1.msra.mxu0 0.0
        %1255 = vmatprep.subr.mxu0 0.0
        %1256 = vmatpush1.msra.mxu0 0.0
        %1257 = vmatprep.mubr.f32.mxu0 0.0
        %1258 = vmatmul.mubr.f32.gmra.mrb[0].mxu0 %v410
        %v1259 = vpop.f32.mrb[0].mxu0
        %v1260 = vadd.f32 0.0, %v1259
        %v1261 = vpop.f32.mrb[0].mxu0
        %v1262 = vadd.f32 0.0, %v1261
        %1263 = vdwg.mxu0
        %1264 = vmatprep.subr.mxu0 %v400
        %1265 = vmatpush1.msra.mxu0 %v399
        %1266 = vmatprep.subr.mxu0 0.0
        %1267 = vmatpush1.msra.mxu0 0.0
        %1268 = vmatprep.subr.mxu0 0.0
        %1269 = vmatpush1.msra.mxu0 0.0
        %1270 = vmatprep.subr.mxu0 0.0
        %1271 = vmatpush1.msra.mxu0 0.0
        %1272 = vmatprep.subr.mxu0 0.0
        %1273 = vmatpush1.msra.mxu0 0.0
        %1274 = vmatprep.subr.mxu0 0.0
        %1275 = vmatpush1.msra.mxu0 0.0
        %1276 = vmatprep.subr.mxu0 0.0
        %1277 = vmatpush1.msra.mxu0 0.0
        %1278 = vmatprep.subr.mxu0 0.0
        %1279 = vmatpush1.msra.mxu0 0.0
        %1280 = vmatprep.subr.mxu0 0.0
        %1281 = vmatpush1.msra.mxu0 0.0
        %1282 = vmatprep.subr.mxu0 0.0
        %1283 = vmatpush1.msra.mxu0 0.0
        %1284 = vmatprep.subr.mxu0 0.0
        %1285 = vmatpush1.msra.mxu0 0.0
        %1286 = vmatprep.subr.mxu0 0.0
        %1287 = vmatpush1.msra.mxu0 0.0
        %1288 = vmatprep.subr.mxu0 0.0
        %1289 = vmatpush1.msra.mxu0 0.0
        %1290 = vmatprep.subr.mxu0 0.0
        %1291 = vmatpush1.msra.mxu0 0.0
        %1292 = vmatprep.subr.mxu0 0.0
        %1293 = vmatpush1.msra.mxu0 0.0
        %1294 = vmatprep.subr.mxu0 0.0
        %1295 = vmatpush1.msra.mxu0 0.0
        %1296 = vmatprep.subr.mxu0 0.0
        %1297 = vmatpush1.msra.mxu0 0.0
        %1298 = vmatprep.subr.mxu0 0.0
        %1299 = vmatpush1.msra.mxu0 0.0
        %1300 = vmatprep.subr.mxu0 0.0
        %1301 = vmatpush1.msra.mxu0 0.0
        %1302 = vmatprep.subr.mxu0 0.0
        %1303 = vmatpush1.msra.mxu0 0.0
        %1304 = vmatprep.subr.mxu0 0.0
        %1305 = vmatpush1.msra.mxu0 0.0
        %1306 = vmatprep.subr.mxu0 0.0
        %1307 = vmatpush1.msra.mxu0 0.0
        %1308 = vmatprep.subr.mxu0 0.0
        %1309 = vmatpush1.msra.mxu0 0.0
        %1310 = vmatprep.subr.mxu0 0.0
        %1311 = vmatpush1.msra.mxu0 0.0
        %1312 = vmatprep.subr.mxu0 0.0
        %1313 = vmatpush1.msra.mxu0 0.0
        %1314 = vmatprep.subr.mxu0 0.0
        %1315 = vmatpush1.msra.mxu0 0.0
        %1316 = vmatprep.subr.mxu0 0.0
        %1317 = vmatpush1.msra.mxu0 0.0
        %1318 = vmatprep.subr.mxu0 0.0
        %1319 = vmatpush1.msra.mxu0 0.0
        %1320 = vmatprep.subr.mxu0 0.0
        %1321 = vmatpush1.msra.mxu0 0.0
        %1322 = vmatprep.subr.mxu0 0.0
        %1323 = vmatpush1.msra.mxu0 0.0
        %1324 = vmatprep.subr.mxu0 0.0
        %1325 = vmatpush1.msra.mxu0 0.0
        %1326 = vmatprep.subr.mxu0 0.0
        %1327 = vmatpush1.msra.mxu0 0.0
        %1328 = vmatprep.mubr.f32.mxu0 0.0
        %1329 = vmatmul.mubr.f32.gmra.mrb[0].mxu0 %v410
        %v1330 = vpop.f32.mrb[0].mxu0
        %v1331 = vadd.f32 0.0, %v1330
        %v1332 = vpop.f32.mrb[0].mxu0
        %v1333 = vadd.f32 0.0, %v1332
        %1334 = vdwg.mxu0
        %1335 = vmatprep.subr.mxu0 %v402
        %1336 = vmatpush1.msra.mxu0 %v401
        %1337 = vmatprep.subr.mxu0 0.0
        %1338 = vmatpush1.msra.mxu0 0.0
        %1339 = vmatprep.subr.mxu0 0.0
        %1340 = vmatpush1.msra.mxu0 0.0
        %1341 = vmatprep.subr.mxu0 0.0
        %1342 = vmatpush1.msra.mxu0 0.0
        %1343 = vmatprep.subr.mxu0 0.0
        %1344 = vmatpush1.msra.mxu0 0.0
        %1345 = vmatprep.subr.mxu0 0.0
        %1346 = vmatpush1.msra.mxu0 0.0
        %1347 = vmatprep.subr.mxu0 0.0
        %1348 = vmatpush1.msra.mxu0 0.0
        %1349 = vmatprep.subr.mxu0 0.0
        %1350 = vmatpush1.msra.mxu0 0.0
        %1351 = vmatprep.subr.mxu0 0.0
        %1352 = vmatpush1.msra.mxu0 0.0
        %1353 = vmatprep.subr.mxu0 0.0
        %1354 = vmatpush1.msra.mxu0 0.0
        %1355 = vmatprep.subr.mxu0 0.0
        %1356 = vmatpush1.msra.mxu0 0.0
        %1357 = vmatprep.subr.mxu0 0.0
        %1358 = vmatpush1.msra.mxu0 0.0
        %1359 = vmatprep.subr.mxu0 0.0
        %1360 = vmatpush1.msra.mxu0 0.0
        %1361 = vmatprep.subr.mxu0 0.0
        %1362 = vmatpush1.msra.mxu0 0.0
        %1363 = vmatprep.subr.mxu0 0.0
        %1364 = vmatpush1.msra.mxu0 0.0
        %1365 = vmatprep.subr.mxu0 0.0
        %1366 = vmatpush1.msra.mxu0 0.0
        %1367 = vmatprep.subr.mxu0 0.0
        %1368 = vmatpush1.msra.mxu0 0.0
        %1369 = vmatprep.subr.mxu0 0.0
        %1370 = vmatpush1.msra.mxu0 0.0
        %1371 = vmatprep.subr.mxu0 0.0
        %1372 = vmatpush1.msra.mxu0 0.0
        %1373 = vmatprep.subr.mxu0 0.0
        %1374 = vmatpush1.msra.mxu0 0.0
        %1375 = vmatprep.subr.mxu0 0.0
        %1376 = vmatpush1.msra.mxu0 0.0
        %1377 = vmatprep.subr.mxu0 0.0
        %1378 = vmatpush1.msra.mxu0 0.0
        %1379 = vmatprep.subr.mxu0 0.0
        %1380 = vmatpush1.msra.mxu0 0.0
        %1381 = vmatprep.subr.mxu0 0.0
        %1382 = vmatpush1.msra.mxu0 0.0
        %1383 = vmatprep.subr.mxu0 0.0
        %1384 = vmatpush1.msra.mxu0 0.0
        %1385 = vmatprep.subr.mxu0 0.0
        %1386 = vmatpush1.msra.mxu0 0.0
        %1387 = vmatprep.subr.mxu0 0.0
        %1388 = vmatpush1.msra.mxu0 0.0
        %1389 = vmatprep.subr.mxu0 0.0
        %1390 = vmatpush1.msra.mxu0 0.0
        %1391 = vmatprep.subr.mxu0 0.0
        %1392 = vmatpush1.msra.mxu0 0.0
        %1393 = vmatprep.subr.mxu0 0.0
        %1394 = vmatpush1.msra.mxu0 0.0
        %1395 = vmatprep.subr.mxu0 0.0
        %1396 = vmatpush1.msra.mxu0 0.0
        %1397 = vmatprep.subr.mxu0 0.0
        %1398 = vmatpush1.msra.mxu0 0.0
        %1399 = vmatprep.mubr.f32.mxu0 0.0
        %1400 = vmatmul.mubr.f32.gmra.mrb[0].mxu0 %v410
        %v1401 = vpop.f32.mrb[0].mxu0
        %v1402 = vadd.f32 0.0, %v1401
        %v1403 = vpop.f32.mrb[0].mxu0
        %v1404 = vadd.f32 0.0, %v1403
        %1405 = vdwg.mxu0
        %1406 = vmatprep.subr.mxu0 %v404
        %1407 = vmatpush1.msra.mxu0 %v403
        %1408 = vmatprep.subr.mxu0 0.0
        %1409 = vmatpush1.msra.mxu0 0.0
        %1410 = vmatprep.subr.mxu0 0.0
        %1411 = vmatpush1.msra.mxu0 0.0
        %1412 = vmatprep.subr.mxu0 0.0
        %1413 = vmatpush1.msra.mxu0 0.0
        %1414 = vmatprep.subr.mxu0 0.0
        %1415 = vmatpush1.msra.mxu0 0.0
        %1416 = vmatprep.subr.mxu0 0.0
        %1417 = vmatpush1.msra.mxu0 0.0
        %1418 = vmatprep.subr.mxu0 0.0
        %1419 = vmatpush1.msra.mxu0 0.0
        %1420 = vmatprep.subr.mxu0 0.0
        %1421 = vmatpush1.msra.mxu0 0.0
        %1422 = vmatprep.subr.mxu0 0.0
        %1423 = vmatpush1.msra.mxu0 0.0
        %1424 = vmatprep.subr.mxu0 0.0
        %1425 = vmatpush1.msra.mxu0 0.0
        %1426 = vmatprep.subr.mxu0 0.0
        %1427 = vmatpush1.msra.mxu0 0.0
        %1428 = vmatprep.subr.mxu0 0.0
        %1429 = vmatpush1.msra.mxu0 0.0
        %1430 = vmatprep.subr.mxu0 0.0
        %1431 = vmatpush1.msra.mxu0 0.0
        %1432 = vmatprep.subr.mxu0 0.0
        %1433 = vmatpush1.msra.mxu0 0.0
        %1434 = vmatprep.subr.mxu0 0.0
        %1435 = vmatpush1.msra.mxu0 0.0
        %1436 = vmatprep.subr.mxu0 0.0
        %1437 = vmatpush1.msra.mxu0 0.0
        %1438 = vmatprep.subr.mxu0 0.0
        %1439 = vmatpush1.msra.mxu0 0.0
        %1440 = vmatprep.subr.mxu0 0.0
        %1441 = vmatpush1.msra.mxu0 0.0
        %1442 = vmatprep.subr.mxu0 0.0
        %1443 = vmatpush1.msra.mxu0 0.0
        %1444 = vmatprep.subr.mxu0 0.0
        %1445 = vmatpush1.msra.mxu0 0.0
        %1446 = vmatprep.subr.mxu0 0.0
        %1447 = vmatpush1.msra.mxu0 0.0
        %1448 = vmatprep.subr.mxu0 0.0
        %1449 = vmatpush1.msra.mxu0 0.0
        %1450 = vmatprep.subr.mxu0 0.0
        %1451 = vmatpush1.msra.mxu0 0.0
        %1452 = vmatprep.subr.mxu0 0.0
        %1453 = vmatpush1.msra.mxu0 0.0
        %1454 = vmatprep.subr.mxu0 0.0
        %1455 = vmatpush1.msra.mxu0 0.0
        %1456 = vmatprep.subr.mxu0 0.0
        %1457 = vmatpush1.msra.mxu0 0.0
        %1458 = vmatprep.subr.mxu0 0.0
        %1459 = vmatpush1.msra.mxu0 0.0
        %1460 = vmatprep.subr.mxu0 0.0
        %1461 = vmatpush1.msra.mxu0 0.0
        %1462 = vmatprep.subr.mxu0 0.0
        %1463 = vmatpush1.msra.mxu0 0.0
        %1464 = vmatprep.subr.mxu0 0.0
        %1465 = vmatpush1.msra.mxu0 0.0
        %1466 = vmatprep.subr.mxu0 0.0
        %1467 = vmatpush1.msra.mxu0 0.0
        %1468 = vmatprep.subr.mxu0 0.0
        %1469 = vmatpush1.msra.mxu0 0.0
        %1470 = vmatprep.mubr.f32.mxu0 0.0
        %1471 = vmatmul.mubr.f32.gmra.mrb[0].mxu0 %v410
        %v1472 = vpop.f32.mrb[0].mxu0
        %v1473 = vadd.f32 0.0, %v1472
        %v1474 = vpop.f32.mrb[0].mxu0
        %v1475 = vadd.f32 0.0, %v1474
        %1476 = vdwg.mxu0
        %1477 = vmatprep.subr.mxu0 %v406
        %1478 = vmatpush1.msra.mxu0 %v405
        %1479 = vmatprep.subr.mxu0 0.0
        %1480 = vmatpush1.msra.mxu0 0.0
        %1481 = vmatprep.subr.mxu0 0.0
        %1482 = vmatpush1.msra.mxu0 0.0
        %1483 = vmatprep.subr.mxu0 0.0
        %1484 = vmatpush1.msra.mxu0 0.0
        %1485 = vmatprep.subr.mxu0 0.0
        %1486 = vmatpush1.msra.mxu0 0.0
        %1487 = vmatprep.subr.mxu0 0.0
        %1488 = vmatpush1.msra.mxu0 0.0
        %1489 = vmatprep.subr.mxu0 0.0
        %1490 = vmatpush1.msra.mxu0 0.0
        %1491 = vmatprep.subr.mxu0 0.0
        %1492 = vmatpush1.msra.mxu0 0.0
        %1493 = vmatprep.subr.mxu0 0.0
        %1494 = vmatpush1.msra.mxu0 0.0
        %1495 = vmatprep.subr.mxu0 0.0
        %1496 = vmatpush1.msra.mxu0 0.0
        %1497 = vmatprep.subr.mxu0 0.0
        %1498 = vmatpush1.msra.mxu0 0.0
        %1499 = vmatprep.subr.mxu0 0.0
        %1500 = vmatpush1.msra.mxu0 0.0
        %1501 = vmatprep.subr.mxu0 0.0
        %1502 = vmatpush1.msra.mxu0 0.0
        %1503 = vmatprep.subr.mxu0 0.0
        %1504 = vmatpush1.msra.mxu0 0.0
        %1505 = vmatprep.subr.mxu0 0.0
        %1506 = vmatpush1.msra.mxu0 0.0
        %1507 = vmatprep.subr.mxu0 0.0
        %1508 = vmatpush1.msra.mxu0 0.0
        %1509 = vmatprep.subr.mxu0 0.0
        %1510 = vmatpush1.msra.mxu0 0.0
        %1511 = vmatprep.subr.mxu0 0.0
        %1512 = vmatpush1.msra.mxu0 0.0
        %1513 = vmatprep.subr.mxu0 0.0
        %1514 = vmatpush1.msra.mxu0 0.0
        %1515 = vmatprep.subr.mxu0 0.0
        %1516 = vmatpush1.msra.mxu0 0.0
        %1517 = vmatprep.subr.mxu0 0.0
        %1518 = vmatpush1.msra.mxu0 0.0
        %1519 = vmatprep.subr.mxu0 0.0
        %1520 = vmatpush1.msra.mxu0 0.0
        %1521 = vmatprep.subr.mxu0 0.0
        %1522 = vmatpush1.msra.mxu0 0.0
        %1523 = vmatprep.subr.mxu0 0.0
        %1524 = vmatpush1.msra.mxu0 0.0
        %1525 = vmatprep.subr.mxu0 0.0
        %1526 = vmatpush1.msra.mxu0 0.0
        %1527 = vmatprep.subr.mxu0 0.0
        %1528 = vmatpush1.msra.mxu0 0.0
        %1529 = vmatprep.subr.mxu0 0.0
        %1530 = vmatpush1.msra.mxu0 0.0
        %1531 = vmatprep.subr.mxu0 0.0
        %1532 = vmatpush1.msra.mxu0 0.0
        %1533 = vmatprep.subr.mxu0 0.0
        %1534 = vmatpush1.msra.mxu0 0.0
        %1535 = vmatprep.subr.mxu0 0.0
        %1536 = vmatpush1.msra.mxu0 0.0
        %1537 = vmatprep.subr.mxu0 0.0
        %1538 = vmatpush1.msra.mxu0 0.0
        %1539 = vmatprep.subr.mxu0 0.0
        %1540 = vmatpush1.msra.mxu0 0.0
        %1541 = vmatprep.mubr.f32.mxu0 0.0
        %1542 = vmatmul.mubr.f32.gmra.mrb[0].mxu0 %v410
        %v1543 = vpop.f32.mrb[0].mxu0
        %v1544 = vadd.f32 0.0, %v1543
        %v1545 = vpop.f32.mrb[0].mxu0
        %v1546 = vadd.f32 0.0, %v1545
        %1547 = vdwg.mxu0
        %v1548 = vxor.u32 %v479, 2147483648
        %v1549 = vxor.u32 %v481, 2147483648
        %v1550 = vxor.u32 %v550, 2147483648
        %v1551 = vxor.u32 %v552, 2147483648
        %v1552 = vxor.u32 %v621, 2147483648
        %v1553 = vxor.u32 %v623, 2147483648
        %v1554 = vxor.u32 %v692, 2147483648
        %v1555 = vxor.u32 %v694, 2147483648
        %v1556 = vxor.u32 %v763, 2147483648
        %v1557 = vxor.u32 %v765, 2147483648
        %v1558 = vxor.u32 %v834, 2147483648
        %v1559 = vxor.u32 %v836, 2147483648
        %v1560 = vxor.u32 %v905, 2147483648
        %v1561 = vxor.u32 %v907, 2147483648
        %v1562 = vxor.u32 %v976, 2147483648
        %v1563 = vxor.u32 %v978, 2147483648
        %v1564 = vxor.u32 %v1047, 2147483648
        %v1565 = vxor.u32 %v1049, 2147483648
        %v1566 = vxor.u32 %v1118, 2147483648
        %v1567 = vxor.u32 %v1120, 2147483648
        %v1568 = vxor.u32 %v1189, 2147483648
        %v1569 = vxor.u32 %v1191, 2147483648
        %v1570 = vxor.u32 %v1260, 2147483648
        %v1571 = vxor.u32 %v1262, 2147483648
        %v1572 = vxor.u32 %v1331, 2147483648
        %v1573 = vxor.u32 %v1333, 2147483648
        %v1574 = vxor.u32 %v1402, 2147483648
        %v1575 = vxor.u32 %v1404, 2147483648
        %v1576 = vxor.u32 %v1473, 2147483648
        %v1577 = vxor.u32 %v1475, 2147483648
        %v1578 = vxor.u32 %v1544, 2147483648
        %v1579 = vxor.u32 %v1546, 2147483648
        %v1580 = vmul.f32 %v1548, 1.442695
        %v1581 = vpow.pop %v1580
        %v1582 = vmul.f32 %v1549, 1.442695
        %v1583 = vpow.pop %v1582
        %v1584 = vmul.f32 %v1550, 1.442695
        %v1585 = vpow.pop %v1584
        %v1586 = vmul.f32 %v1551, 1.442695
        %v1587 = vpow.pop %v1586
        %v1588 = vmul.f32 %v1552, 1.442695
        %v1589 = vpow.pop %v1588
        %v1590 = vmul.f32 %v1553, 1.442695
        %v1591 = vpow.pop %v1590
        %v1592 = vmul.f32 %v1554, 1.442695
        %v1593 = vpow.pop %v1592
        %v1594 = vmul.f32 %v1555, 1.442695
        %v1595 = vpow.pop %v1594
        %v1596 = vmul.f32 %v1556, 1.442695
        %v1597 = vpow.pop %v1596
        %v1598 = vmul.f32 %v1557, 1.442695
        %v1599 = vpow.pop %v1598
        %v1600 = vmul.f32 %v1558, 1.442695
        %v1601 = vpow.pop %v1600
        %v1602 = vmul.f32 %v1559, 1.442695
        %v1603 = vpow.pop %v1602
        %v1604 = vmul.f32 %v1560, 1.442695
        %v1605 = vpow.pop %v1604
        %v1606 = vmul.f32 %v1561, 1.442695
        %v1607 = vpow.pop %v1606
        %v1608 = vmul.f32 %v1562, 1.442695
        %v1609 = vpow.pop %v1608
        %v1610 = vmul.f32 %v1563, 1.442695
        %v1611 = vpow.pop %v1610
        %v1612 = vmul.f32 %v1564, 1.442695
        %v1613 = vpow.pop %v1612
        %v1614 = vmul.f32 %v1565, 1.442695
        %v1615 = vpow.pop %v1614
        %v1616 = vmul.f32 %v1566, 1.442695
        %v1617 = vpow.pop %v1616
        %v1618 = vmul.f32 %v1567, 1.442695
        %v1619 = vpow.pop %v1618
        %v1620 = vmul.f32 %v1568, 1.442695
        %v1621 = vpow.pop %v1620
        %v1622 = vmul.f32 %v1569, 1.442695
        %v1623 = vpow.pop %v1622
        %v1624 = vmul.f32 %v1570, 1.442695
        %v1625 = vpow.pop %v1624
        %v1626 = vmul.f32 %v1571, 1.442695
        %v1627 = vpow.pop %v1626
        %v1628 = vmul.f32 %v1572, 1.442695
        %v1629 = vpow.pop %v1628
        %v1630 = vmul.f32 %v1573, 1.442695
        %v1631 = vpow.pop %v1630
        %v1632 = vmul.f32 %v1574, 1.442695
        %v1633 = vpow.pop %v1632
        %v1634 = vmul.f32 %v1575, 1.442695
        %v1635 = vpow.pop %v1634
        %v1636 = vmul.f32 %v1576, 1.442695
        %v1637 = vpow.pop %v1636
        %v1638 = vmul.f32 %v1577, 1.442695
        %v1639 = vpow.pop %v1638
        %v1640 = vmul.f32 %v1578, 1.442695
        %v1641 = vpow.pop %v1640
        %v1642 = vmul.f32 %v1579, 1.442695
        %v1643 = vpow.pop %v1642
        %v1644 = vadd.f32 %v1581, 1.0
        %v1645 = vadd.f32 %v1583, 1.0
        %v1646 = vadd.f32 %v1585, 1.0
        %v1647 = vadd.f32 %v1587, 1.0
        %v1648 = vadd.f32 %v1589, 1.0
        %v1649 = vadd.f32 %v1591, 1.0
        %v1650 = vadd.f32 %v1593, 1.0
        %v1651 = vadd.f32 %v1595, 1.0
        %v1652 = vadd.f32 %v1597, 1.0
        %v1653 = vadd.f32 %v1599, 1.0
        %v1654 = vadd.f32 %v1601, 1.0
        %v1655 = vadd.f32 %v1603, 1.0
        %v1656 = vadd.f32 %v1605, 1.0
        %v1657 = vadd.f32 %v1607, 1.0
        %v1658 = vadd.f32 %v1609, 1.0
        %v1659 = vadd.f32 %v1611, 1.0
        %v1660 = vadd.f32 %v1613, 1.0
        %v1661 = vadd.f32 %v1615, 1.0
        %v1662 = vadd.f32 %v1617, 1.0
        %v1663 = vadd.f32 %v1619, 1.0
        %v1664 = vadd.f32 %v1621, 1.0
        %v1665 = vadd.f32 %v1623, 1.0
        %v1666 = vadd.f32 %v1625, 1.0
        %v1667 = vadd.f32 %v1627, 1.0
        %v1668 = vadd.f32 %v1629, 1.0
        %v1669 = vadd.f32 %v1631, 1.0
        %v1670 = vadd.f32 %v1633, 1.0
        %v1671 = vadd.f32 %v1635, 1.0
        %v1672 = vadd.f32 %v1637, 1.0
        %v1673 = vadd.f32 %v1639, 1.0
        %v1674 = vadd.f32 %v1641, 1.0
        %v1675 = vadd.f32 %v1643, 1.0
        %v1676 = vrcp.pop %v1644
        %v1677 = vmul.f32 1.0, %v1676
        %v1678 = vrcp.pop %v1645
        %v1679 = vmul.f32 1.0, %v1678
        %v1680 = vrcp.pop %v1646
        %v1681 = vmul.f32 1.0, %v1680
        %v1682 = vrcp.pop %v1647
        %v1683 = vmul.f32 1.0, %v1682
        %v1684 = vrcp.pop %v1648
        %v1685 = vmul.f32 1.0, %v1684
        %v1686 = vrcp.pop %v1649
        %v1687 = vmul.f32 1.0, %v1686
        %v1688 = vrcp.pop %v1650
        %v1689 = vmul.f32 1.0, %v1688
        %v1690 = vrcp.pop %v1651
        %v1691 = vmul.f32 1.0, %v1690
        %v1692 = vrcp.pop %v1652
        %v1693 = vmul.f32 1.0, %v1692
        %v1694 = vrcp.pop %v1653
        %v1695 = vmul.f32 1.0, %v1694
        %v1696 = vrcp.pop %v1654
        %v1697 = vmul.f32 1.0, %v1696
        %v1698 = vrcp.pop %v1655
        %v1699 = vmul.f32 1.0, %v1698
        %v1700 = vrcp.pop %v1656
        %v1701 = vmul.f32 1.0, %v1700
        %v1702 = vrcp.pop %v1657
        %v1703 = vmul.f32 1.0, %v1702
        %v1704 = vrcp.pop %v1658
        %v1705 = vmul.f32 1.0, %v1704
        %v1706 = vrcp.pop %v1659
        %v1707 = vmul.f32 1.0, %v1706
        %v1708 = vrcp.pop %v1660
        %v1709 = vmul.f32 1.0, %v1708
        %v1710 = vrcp.pop %v1661
        %v1711 = vmul.f32 1.0, %v1710
        %v1712 = vrcp.pop %v1662
        %v1713 = vmul.f32 1.0, %v1712
        %v1714 = vrcp.pop %v1663
        %v1715 = vmul.f32 1.0, %v1714
        %v1716 = vrcp.pop %v1664
        %v1717 = vmul.f32 1.0, %v1716
        %v1718 = vrcp.pop %v1665
        %v1719 = vmul.f32 1.0, %v1718
        %v1720 = vrcp.pop %v1666
        %v1721 = vmul.f32 1.0, %v1720
        %v1722 = vrcp.pop %v1667
        %v1723 = vmul.f32 1.0, %v1722
        %v1724 = vrcp.pop %v1668
        %v1725 = vmul.f32 1.0, %v1724
        %v1726 = vrcp.pop %v1669
        %v1727 = vmul.f32 1.0, %v1726
        %v1728 = vrcp.pop %v1670
        %v1729 = vmul.f32 1.0, %v1728
        %v1730 = vrcp.pop %v1671
        %v1731 = vmul.f32 1.0, %v1730
        %v1732 = vrcp.pop %v1672
        %v1733 = vmul.f32 1.0, %v1732
        %v1734 = vrcp.pop %v1673
        %v1735 = vmul.f32 1.0, %v1734
        %v1736 = vrcp.pop %v1674
        %v1737 = vmul.f32 1.0, %v1736
        %v1738 = vrcp.pop %v1675
        %v1739 = vmul.f32 1.0, %v1738
        %v1740 = vsub.f32 %v343, %v375
        %v1741 = vsub.f32 %v344, %v376
        %v1742 = vsub.f32 %v345, %v377
        %v1743 = vsub.f32 %v346, %v378
        %v1744 = vsub.f32 %v347, %v379
        %v1745 = vsub.f32 %v348, %v380
        %v1746 = vsub.f32 %v349, %v381
        %v1747 = vsub.f32 %v350, %v382
        %v1748 = vsub.f32 %v351, %v383
        %v1749 = vsub.f32 %v352, %v384
        %v1750 = vsub.f32 %v353, %v385
        %v1751 = vsub.f32 %v354, %v386
        %v1752 = vsub.f32 %v355, %v387
        %v1753 = vsub.f32 %v356, %v388
        %v1754 = vsub.f32 %v357, %v389
        %v1755 = vsub.f32 %v358, %v390
        %v1756 = vsub.f32 %v359, %v391
        %v1757 = vsub.f32 %v360, %v392
        %v1758 = vsub.f32 %v361, %v393
        %v1759 = vsub.f32 %v362, %v394
        %v1760 = vsub.f32 %v363, %v395
        %v1761 = vsub.f32 %v364, %v396
        %v1762 = vsub.f32 %v365, %v397
        %v1763 = vsub.f32 %v366, %v398
        %v1764 = vsub.f32 %v367, %v399
        %v1765 = vsub.f32 %v368, %v400
        %v1766 = vsub.f32 %v369, %v401
        %v1767 = vsub.f32 %v370, %v402
        %v1768 = vsub.f32 %v371, %v403
        %v1769 = vsub.f32 %v372, %v404
        %v1770 = vsub.f32 %v373, %v405
        %v1771 = vsub.f32 %v374, %v406
        %v1772 = vmul.f32 %v1740, %v1740
        %v1773 = vmul.f32 %v1741, %v1741
        %v1774 = vmul.f32 %v1742, %v1742
        %v1775 = vmul.f32 %v1743, %v1743
        %v1776 = vmul.f32 %v1744, %v1744
        %v1777 = vmul.f32 %v1745, %v1745
        %v1778 = vmul.f32 %v1746, %v1746
        %v1779 = vmul.f32 %v1747, %v1747
        %v1780 = vmul.f32 %v1748, %v1748
        %v1781 = vmul.f32 %v1749, %v1749
        %v1782 = vmul.f32 %v1750, %v1750
        %v1783 = vmul.f32 %v1751, %v1751
        %v1784 = vmul.f32 %v1752, %v1752
        %v1785 = vmul.f32 %v1753, %v1753
        %v1786 = vmul.f32 %v1754, %v1754
        %v1787 = vmul.f32 %v1755, %v1755
        %v1788 = vmul.f32 %v1756, %v1756
        %v1789 = vmul.f32 %v1757, %v1757
        %v1790 = vmul.f32 %v1758, %v1758
        %v1791 = vmul.f32 %v1759, %v1759
        %v1792 = vmul.f32 %v1760, %v1760
        %v1793 = vmul.f32 %v1761, %v1761
        %v1794 = vmul.f32 %v1762, %v1762
        %v1795 = vmul.f32 %v1763, %v1763
        %v1796 = vmul.f32 %v1764, %v1764
        %v1797 = vmul.f32 %v1765, %v1765
        %v1798 = vmul.f32 %v1766, %v1766
        %v1799 = vmul.f32 %v1767, %v1767
        %v1800 = vmul.f32 %v1768, %v1768
        %v1801 = vmul.f32 %v1769, %v1769
        %v1802 = vmul.f32 %v1770, %v1770
        %v1803 = vmul.f32 %v1771, %v1771
        %v1804 = vrot.slane %v1772, 4
        %v1805 = vadd.f32 %v1772, %v1804
        %v1806 = vrot.slane %v1805, 2
        %v1807 = vadd.f32 %v1805, %v1806
        %v1808 = vrot.slane %v1807, 1
        %v1809 = vadd.f32 %v1807, %v1808
        %v1810 = vrot.slane %v1773, 4
        %v1811 = vadd.f32 %v1773, %v1810
        %v1812 = vrot.slane %v1811, 2
        %v1813 = vadd.f32 %v1811, %v1812
        %v1814 = vrot.slane %v1813, 1
        %v1815 = vadd.f32 %v1813, %v1814
        %v1816 = vrot.slane %v1774, 4
        %v1817 = vadd.f32 %v1774, %v1816
        %v1818 = vrot.slane %v1817, 2
        %v1819 = vadd.f32 %v1817, %v1818
        %v1820 = vrot.slane %v1819, 1
        %v1821 = vadd.f32 %v1819, %v1820
        %v1822 = vrot.slane %v1775, 4
        %v1823 = vadd.f32 %v1775, %v1822
        %v1824 = vrot.slane %v1823, 2
        %v1825 = vadd.f32 %v1823, %v1824
        %v1826 = vrot.slane %v1825, 1
        %v1827 = vadd.f32 %v1825, %v1826
        %v1828 = vrot.slane %v1776, 4
        %v1829 = vadd.f32 %v1776, %v1828
        %v1830 = vrot.slane %v1829, 2
        %v1831 = vadd.f32 %v1829, %v1830
        %v1832 = vrot.slane %v1831, 1
        %v1833 = vadd.f32 %v1831, %v1832
        %v1834 = vrot.slane %v1777, 4
        %v1835 = vadd.f32 %v1777, %v1834
        %v1836 = vrot.slane %v1835, 2
        %v1837 = vadd.f32 %v1835, %v1836
        %v1838 = vrot.slane %v1837, 1
        %v1839 = vadd.f32 %v1837, %v1838
        %v1840 = vrot.slane %v1778, 4
        %v1841 = vadd.f32 %v1778, %v1840
        %v1842 = vrot.slane %v1841, 2
        %v1843 = vadd.f32 %v1841, %v1842
        %v1844 = vrot.slane %v1843, 1
        %v1845 = vadd.f32 %v1843, %v1844
        %v1846 = vrot.slane %v1779, 4
        %v1847 = vadd.f32 %v1779, %v1846
        %v1848 = vrot.slane %v1847, 2
        %v1849 = vadd.f32 %v1847, %v1848
        %v1850 = vrot.slane %v1849, 1
        %v1851 = vadd.f32 %v1849, %v1850
        %v1852 = vrot.slane %v1780, 4
        %v1853 = vadd.f32 %v1780, %v1852
        %v1854 = vrot.slane %v1853, 2
        %v1855 = vadd.f32 %v1853, %v1854
        %v1856 = vrot.slane %v1855, 1
        %v1857 = vadd.f32 %v1855, %v1856
        %v1858 = vrot.slane %v1781, 4
        %v1859 = vadd.f32 %v1781, %v1858
        %v1860 = vrot.slane %v1859, 2
        %v1861 = vadd.f32 %v1859, %v1860
        %v1862 = vrot.slane %v1861, 1
        %v1863 = vadd.f32 %v1861, %v1862
        %v1864 = vrot.slane %v1782, 4
        %v1865 = vadd.f32 %v1782, %v1864
        %v1866 = vrot.slane %v1865, 2
        %v1867 = vadd.f32 %v1865, %v1866
        %v1868 = vrot.slane %v1867, 1
        %v1869 = vadd.f32 %v1867, %v1868
        %v1870 = vrot.slane %v1783, 4
        %v1871 = vadd.f32 %v1783, %v1870
        %v1872 = vrot.slane %v1871, 2
        %v1873 = vadd.f32 %v1871, %v1872
        %v1874 = vrot.slane %v1873, 1
        %v1875 = vadd.f32 %v1873, %v1874
        %v1876 = vrot.slane %v1784, 4
        %v1877 = vadd.f32 %v1784, %v1876
        %v1878 = vrot.slane %v1877, 2
        %v1879 = vadd.f32 %v1877, %v1878
        %v1880 = vrot.slane %v1879, 1
        %v1881 = vadd.f32 %v1879, %v1880
        %v1882 = vrot.slane %v1785, 4
        %v1883 = vadd.f32 %v1785, %v1882
        %v1884 = vrot.slane %v1883, 2
        %v1885 = vadd.f32 %v1883, %v1884
        %v1886 = vrot.slane %v1885, 1
        %v1887 = vadd.f32 %v1885, %v1886
        %v1888 = vrot.slane %v1786, 4
        %v1889 = vadd.f32 %v1786, %v1888
        %v1890 = vrot.slane %v1889, 2
        %v1891 = vadd.f32 %v1889, %v1890
        %v1892 = vrot.slane %v1891, 1
        %v1893 = vadd.f32 %v1891, %v1892
        %v1894 = vrot.slane %v1787, 4
        %v1895 = vadd.f32 %v1787, %v1894
        %v1896 = vrot.slane %v1895, 2
        %v1897 = vadd.f32 %v1895, %v1896
        %v1898 = vrot.slane %v1897, 1
        %v1899 = vadd.f32 %v1897, %v1898
        %v1900 = vrot.slane %v1788, 4
        %v1901 = vadd.f32 %v1788, %v1900
        %v1902 = vrot.slane %v1901, 2
        %v1903 = vadd.f32 %v1901, %v1902
        %v1904 = vrot.slane %v1903, 1
        %v1905 = vadd.f32 %v1903, %v1904
        %v1906 = vrot.slane %v1789, 4
        %v1907 = vadd.f32 %v1789, %v1906
        %v1908 = vrot.slane %v1907, 2
        %v1909 = vadd.f32 %v1907, %v1908
        %v1910 = vrot.slane %v1909, 1
        %v1911 = vadd.f32 %v1909, %v1910
        %v1912 = vrot.slane %v1790, 4
        %v1913 = vadd.f32 %v1790, %v1912
        %v1914 = vrot.slane %v1913, 2
        %v1915 = vadd.f32 %v1913, %v1914
        %v1916 = vrot.slane %v1915, 1
        %v1917 = vadd.f32 %v1915, %v1916
        %v1918 = vrot.slane %v1791, 4
        %v1919 = vadd.f32 %v1791, %v1918
        %v1920 = vrot.slane %v1919, 2
        %v1921 = vadd.f32 %v1919, %v1920
        %v1922 = vrot.slane %v1921, 1
        %v1923 = vadd.f32 %v1921, %v1922
        %v1924 = vrot.slane %v1792, 4
        %v1925 = vadd.f32 %v1792, %v1924
        %v1926 = vrot.slane %v1925, 2
        %v1927 = vadd.f32 %v1925, %v1926
        %v1928 = vrot.slane %v1927, 1
        %v1929 = vadd.f32 %v1927, %v1928
        %v1930 = vrot.slane %v1793, 4
        %v1931 = vadd.f32 %v1793, %v1930
        %v1932 = vrot.slane %v1931, 2
        %v1933 = vadd.f32 %v1931, %v1932
        %v1934 = vrot.slane %v1933, 1
        %v1935 = vadd.f32 %v1933, %v1934
        %v1936 = vrot.slane %v1794, 4
        %v1937 = vadd.f32 %v1794, %v1936
        %v1938 = vrot.slane %v1937, 2
        %v1939 = vadd.f32 %v1937, %v1938
        %v1940 = vrot.slane %v1939, 1
        %v1941 = vadd.f32 %v1939, %v1940
        %v1942 = vrot.slane %v1795, 4
        %v1943 = vadd.f32 %v1795, %v1942
        %v1944 = vrot.slane %v1943, 2
        %v1945 = vadd.f32 %v1943, %v1944
        %v1946 = vrot.slane %v1945, 1
        %v1947 = vadd.f32 %v1945, %v1946
        %v1948 = vrot.slane %v1796, 4
        %v1949 = vadd.f32 %v1796, %v1948
        %v1950 = vrot.slane %v1949, 2
        %v1951 = vadd.f32 %v1949, %v1950
        %v1952 = vrot.slane %v1951, 1
        %v1953 = vadd.f32 %v1951, %v1952
        %v1954 = vrot.slane %v1797, 4
        %v1955 = vadd.f32 %v1797, %v1954
        %v1956 = vrot.slane %v1955, 2
        %v1957 = vadd.f32 %v1955, %v1956
        %v1958 = vrot.slane %v1957, 1
        %v1959 = vadd.f32 %v1957, %v1958
        %v1960 = vrot.slane %v1798, 4
        %v1961 = vadd.f32 %v1798, %v1960
        %v1962 = vrot.slane %v1961, 2
        %v1963 = vadd.f32 %v1961, %v1962
        %v1964 = vrot.slane %v1963, 1
        %v1965 = vadd.f32 %v1963, %v1964
        %v1966 = vrot.slane %v1799, 4
        %v1967 = vadd.f32 %v1799, %v1966
        %v1968 = vrot.slane %v1967, 2
        %v1969 = vadd.f32 %v1967, %v1968
        %v1970 = vrot.slane %v1969, 1
        %v1971 = vadd.f32 %v1969, %v1970
        %v1972 = vrot.slane %v1800, 4
        %v1973 = vadd.f32 %v1800, %v1972
        %v1974 = vrot.slane %v1973, 2
        %v1975 = vadd.f32 %v1973, %v1974
        %v1976 = vrot.slane %v1975, 1
        %v1977 = vadd.f32 %v1975, %v1976
        %v1978 = vrot.slane %v1801, 4
        %v1979 = vadd.f32 %v1801, %v1978
        %v1980 = vrot.slane %v1979, 2
        %v1981 = vadd.f32 %v1979, %v1980
        %v1982 = vrot.slane %v1981, 1
        %v1983 = vadd.f32 %v1981, %v1982
        %v1984 = vrot.slane %v1802, 4
        %v1985 = vadd.f32 %v1802, %v1984
        %v1986 = vrot.slane %v1985, 2
        %v1987 = vadd.f32 %v1985, %v1986
        %v1988 = vrot.slane %v1987, 1
        %v1989 = vadd.f32 %v1987, %v1988
        %v1990 = vrot.slane %v1803, 4
        %v1991 = vadd.f32 %v1803, %v1990
        %v1992 = vrot.slane %v1991, 2
        %v1993 = vadd.f32 %v1991, %v1992
        %v1994 = vrot.slane %v1993, 1
        %v1995 = vadd.f32 %v1993, %v1994
        %v1996 = vld [vmem:[%s325] sm:$0x3f]
        %v1997 = vmul.f32 %v1677, %v1677
        %v1998 = vmul.f32 %v1679, %v1679
        %v1999 = vmul.f32 %v1681, %v1681
        %v2000 = vmul.f32 %v1683, %v1683
        %v2001 = vmul.f32 %v1685, %v1685
        %v2002 = vmul.f32 %v1687, %v1687
        %v2003 = vmul.f32 %v1689, %v1689
        %v2004 = vmul.f32 %v1691, %v1691
        %v2005 = vmul.f32 %v1693, %v1693
        %v2006 = vmul.f32 %v1695, %v1695
        %v2007 = vmul.f32 %v1697, %v1697
        %v2008 = vmul.f32 %v1699, %v1699
        %v2009 = vmul.f32 %v1701, %v1701
        %v2010 = vmul.f32 %v1703, %v1703
        %v2011 = vmul.f32 %v1705, %v1705
        %v2012 = vmul.f32 %v1707, %v1707
        %v2013 = vmul.f32 %v1709, %v1709
        %v2014 = vmul.f32 %v1711, %v1711
        %v2015 = vmul.f32 %v1713, %v1713
        %v2016 = vmul.f32 %v1715, %v1715
        %v2017 = vmul.f32 %v1717, %v1717
        %v2018 = vmul.f32 %v1719, %v1719
        %v2019 = vmul.f32 %v1721, %v1721
        %v2020 = vmul.f32 %v1723, %v1723
        %v2021 = vmul.f32 %v1725, %v1725
        %v2022 = vmul.f32 %v1727, %v1727
        %v2023 = vmul.f32 %v1729, %v1729
        %v2024 = vmul.f32 %v1731, %v1731
        %v2025 = vmul.f32 %v1733, %v1733
        %v2026 = vmul.f32 %v1735, %v1735
        %v2027 = vmul.f32 %v1737, %v1737
        %v2028 = vmul.f32 %v1739, %v1739
        %v2029 = vmul.f32 %v1997, %v1809
        %v2030 = vmul.f32 %v1998, %v1815
        %v2031 = vmul.f32 %v1999, %v1821
        %v2032 = vmul.f32 %v2000, %v1827
        %v2033 = vmul.f32 %v2001, %v1833
        %v2034 = vmul.f32 %v2002, %v1839
        %v2035 = vmul.f32 %v2003, %v1845
        %v2036 = vmul.f32 %v2004, %v1851
        %v2037 = vmul.f32 %v2005, %v1857
        %v2038 = vmul.f32 %v2006, %v1863
        %v2039 = vmul.f32 %v2007, %v1869
        %v2040 = vmul.f32 %v2008, %v1875
        %v2041 = vmul.f32 %v2009, %v1881
        %v2042 = vmul.f32 %v2010, %v1887
        %v2043 = vmul.f32 %v2011, %v1893
        %v2044 = vmul.f32 %v2012, %v1899
        %v2045 = vmul.f32 %v2013, %v1905
        %v2046 = vmul.f32 %v2014, %v1911
        %v2047 = vmul.f32 %v2015, %v1917
        %v2048 = vmul.f32 %v2016, %v1923
        %v2049 = vmul.f32 %v2017, %v1929
        %v2050 = vmul.f32 %v2018, %v1935
        %v2051 = vmul.f32 %v2019, %v1941
        %v2052 = vmul.f32 %v2020, %v1947
        %v2053 = vmul.f32 %v2021, %v1953
        %v2054 = vmul.f32 %v2022, %v1959
        %v2055 = vmul.f32 %v2023, %v1965
        %v2056 = vmul.f32 %v2024, %v1971
        %v2057 = vmul.f32 %v2025, %v1977
        %v2058 = vmul.f32 %v2026, %v1983
        %v2059 = vmul.f32 %v2027, %v1989
        %v2060 = vmul.f32 %v2028, %v1995
        %vm2061 = vcmask 1045504
        %v2062 = vsel %vm2061, %v2029, 0.0
        %v2063 = vsel %vm2061, %v2030, 0.0
        %v2064 = vadd.f32 %v2062, %v2063
        %v2065 = vsel %vm2061, %v2031, 0.0
        %v2066 = vadd.f32 %v2064, %v2065
        %v2067 = vsel %vm2061, %v2032, 0.0
        %v2068 = vadd.f32 %v2066, %v2067
        %v2069 = vsel %vm2061, %v2033, 0.0
        %v2070 = vadd.f32 %v2068, %v2069
        %v2071 = vsel %vm2061, %v2034, 0.0
        %v2072 = vadd.f32 %v2070, %v2071
        %v2073 = vsel %vm2061, %v2035, 0.0
        %v2074 = vadd.f32 %v2072, %v2073
        %v2075 = vsel %vm2061, %v2036, 0.0
        %v2076 = vadd.f32 %v2074, %v2075
        %v2077 = vsel %vm2061, %v2037, 0.0
        %v2078 = vadd.f32 %v2076, %v2077
        %v2079 = vsel %vm2061, %v2038, 0.0
        %v2080 = vadd.f32 %v2078, %v2079
        %v2081 = vsel %vm2061, %v2039, 0.0
        %v2082 = vadd.f32 %v2080, %v2081
        %v2083 = vsel %vm2061, %v2040, 0.0
        %v2084 = vadd.f32 %v2082, %v2083
        %v2085 = vsel %vm2061, %v2041, 0.0
        %v2086 = vadd.f32 %v2084, %v2085
        %v2087 = vsel %vm2061, %v2042, 0.0
        %v2088 = vadd.f32 %v2086, %v2087
        %v2089 = vsel %vm2061, %v2043, 0.0
        %v2090 = vadd.f32 %v2088, %v2089
        %v2091 = vsel %vm2061, %v2044, 0.0
        %v2092 = vadd.f32 %v2090, %v2091
        %v2093 = vsel %vm2061, %v2045, 0.0
        %v2094 = vadd.f32 %v2092, %v2093
        %v2095 = vsel %vm2061, %v2046, 0.0
        %v2096 = vadd.f32 %v2094, %v2095
        %v2097 = vsel %vm2061, %v2047, 0.0
        %v2098 = vadd.f32 %v2096, %v2097
        %v2099 = vsel %vm2061, %v2048, 0.0
        %v2100 = vadd.f32 %v2098, %v2099
        %v2101 = vsel %vm2061, %v2049, 0.0
        %v2102 = vadd.f32 %v2100, %v2101
        %v2103 = vsel %vm2061, %v2050, 0.0
        %v2104 = vadd.f32 %v2102, %v2103
        %v2105 = vsel %vm2061, %v2051, 0.0
        %v2106 = vadd.f32 %v2104, %v2105
        %v2107 = vsel %vm2061, %v2052, 0.0
        %v2108 = vadd.f32 %v2106, %v2107
        %v2109 = vsel %vm2061, %v2053, 0.0
        %v2110 = vadd.f32 %v2108, %v2109
        %v2111 = vsel %vm2061, %v2054, 0.0
        %v2112 = vadd.f32 %v2110, %v2111
        %v2113 = vsel %vm2061, %v2055, 0.0
        %v2114 = vadd.f32 %v2112, %v2113
        %v2115 = vsel %vm2061, %v2056, 0.0
        %v2116 = vadd.f32 %v2114, %v2115
        %v2117 = vsel %vm2061, %v2057, 0.0
        %v2118 = vadd.f32 %v2116, %v2117
        %v2119 = vsel %vm2061, %v2058, 0.0
        %v2120 = vadd.f32 %v2118, %v2119
        %v2121 = vsel %vm2061, %v2059, 0.0
        %v2122 = vadd.f32 %v2120, %v2121
        %v2123 = vsel %vm2061, %v2060, 0.0
        %v2124 = vadd.f32 %v2122, %v2123
        %2125 = vadd.xlane.f32.xlu0 %v2124
        %v2126 = vpop.xlane.xlu0 %2125
        %v2127 = vadd.f32 %v1996, %v2126
        %vm2128 = vcmask 5120
        %2129 = vst.msk [vmem:[%s325] sm:$0x3f] %vm2128, %v2127
        %v2130 = vld [vmem:[%s329] sm:$0x3f]
        %v2131 = vsel %vm2061, %v1677, 0.0
        %v2132 = vsel %vm2061, %v1679, 0.0
        %v2133 = vadd.f32 %v2131, %v2132
        %v2134 = vsel %vm2061, %v1681, 0.0
        %v2135 = vadd.f32 %v2133, %v2134
        %v2136 = vsel %vm2061, %v1683, 0.0
        %v2137 = vadd.f32 %v2135, %v2136
        %v2138 = vsel %vm2061, %v1685, 0.0
        %v2139 = vadd.f32 %v2137, %v2138
        %v2140 = vsel %vm2061, %v1687, 0.0
        %v2141 = vadd.f32 %v2139, %v2140
        %v2142 = vsel %vm2061, %v1689, 0.0
        %v2143 = vadd.f32 %v2141, %v2142
        %v2144 = vsel %vm2061, %v1691, 0.0
        %v2145 = vadd.f32 %v2143, %v2144
        %v2146 = vsel %vm2061, %v1693, 0.0
        %v2147 = vadd.f32 %v2145, %v2146
        %v2148 = vsel %vm2061, %v1695, 0.0
        %v2149 = vadd.f32 %v2147, %v2148
        %v2150 = vsel %vm2061, %v1697, 0.0
        %v2151 = vadd.f32 %v2149, %v2150
        %v2152 = vsel %vm2061, %v1699, 0.0
        %v2153 = vadd.f32 %v2151, %v2152
        %v2154 = vsel %vm2061, %v1701, 0.0
        %v2155 = vadd.f32 %v2153, %v2154
        %v2156 = vsel %vm2061, %v1703, 0.0
        %v2157 = vadd.f32 %v2155, %v2156
        %v2158 = vsel %vm2061, %v1705, 0.0
        %v2159 = vadd.f32 %v2157, %v2158
        %v2160 = vsel %vm2061, %v1707, 0.0
        %v2161 = vadd.f32 %v2159, %v2160
        %v2162 = vsel %vm2061, %v1709, 0.0
        %v2163 = vadd.f32 %v2161, %v2162
        %v2164 = vsel %vm2061, %v1711, 0.0
        %v2165 = vadd.f32 %v2163, %v2164
        %v2166 = vsel %vm2061, %v1713, 0.0
        %v2167 = vadd.f32 %v2165, %v2166
        %v2168 = vsel %vm2061, %v1715, 0.0
        %v2169 = vadd.f32 %v2167, %v2168
        %v2170 = vsel %vm2061, %v1717, 0.0
        %v2171 = vadd.f32 %v2169, %v2170
        %v2172 = vsel %vm2061, %v1719, 0.0
        %v2173 = vadd.f32 %v2171, %v2172
        %v2174 = vsel %vm2061, %v1721, 0.0
        %v2175 = vadd.f32 %v2173, %v2174
        %v2176 = vsel %vm2061, %v1723, 0.0
        %v2177 = vadd.f32 %v2175, %v2176
        %v2178 = vsel %vm2061, %v1725, 0.0
        %v2179 = vadd.f32 %v2177, %v2178
        %v2180 = vsel %vm2061, %v1727, 0.0
        %v2181 = vadd.f32 %v2179, %v2180
        %v2182 = vsel %vm2061, %v1729, 0.0
        %v2183 = vadd.f32 %v2181, %v2182
        %v2184 = vsel %vm2061, %v1731, 0.0
        %v2185 = vadd.f32 %v2183, %v2184
        %v2186 = vsel %vm2061, %v1733, 0.0
        %v2187 = vadd.f32 %v2185, %v2186
        %v2188 = vsel %vm2061, %v1735, 0.0
        %v2189 = vadd.f32 %v2187, %v2188
        %v2190 = vsel %vm2061, %v1737, 0.0
        %v2191 = vadd.f32 %v2189, %v2190
        %v2192 = vsel %vm2061, %v1739, 0.0
        %v2193 = vadd.f32 %v2191, %v2192
        %2194 = vadd.xlane.f32.xlu0 %v2193
        %v2195 = vpop.xlane.xlu0 %2194
        %v2196 = vadd.f32 %v2130, %v2195
        %2197 = vst.msk [vmem:[%s329] sm:$0x3f] %vm2128, %v2196
        %v2198 = vld [vmem:[%s333] sm:$0xff]
        %v2199 = vadd.f32 %v375, %v376
        %v2200 = vadd.f32 %v2199, %v377
        %v2201 = vadd.f32 %v2200, %v378
        %v2202 = vadd.f32 %v2201, %v379
        %v2203 = vadd.f32 %v2202, %v380
        %v2204 = vadd.f32 %v2203, %v381
        %v2205 = vadd.f32 %v2204, %v382
        %v2206 = vadd.f32 %v2205, %v383
        %v2207 = vadd.f32 %v2206, %v384
        %v2208 = vadd.f32 %v2207, %v385
        %v2209 = vadd.f32 %v2208, %v386
        %v2210 = vadd.f32 %v2209, %v387
        %v2211 = vadd.f32 %v2210, %v388
        %v2212 = vadd.f32 %v2211, %v389
        %v2213 = vadd.f32 %v2212, %v390
        %v2214 = vadd.f32 %v2213, %v391
        %v2215 = vadd.f32 %v2214, %v392
        %v2216 = vadd.f32 %v2215, %v393
        %v2217 = vadd.f32 %v2216, %v394
        %v2218 = vadd.f32 %v2217, %v395
        %v2219 = vadd.f32 %v2218, %v396
        %v2220 = vadd.f32 %v2219, %v397
        %v2221 = vadd.f32 %v2220, %v398
        %v2222 = vadd.f32 %v2221, %v399
        %v2223 = vadd.f32 %v2222, %v400
        %v2224 = vadd.f32 %v2223, %v401
        %v2225 = vadd.f32 %v2224, %v402
        %v2226 = vadd.f32 %v2225, %v403
        %v2227 = vadd.f32 %v2226, %v404
        %v2228 = vadd.f32 %v2227, %v405
        %v2229 = vadd.f32 %v2228, %v406
        %2230 = vadd.xlane.f32.xlu0 %v2229
        %v2231 = vpop.xlane.xlu0 %2230
        %v2232 = vadd.f32 %v2198, %v2231
        %vm2233 = vcmask 7168
        %2234 = vst.msk [vmem:[%s333] sm:$0xff] %vm2233, %v2232
        %p2235 = scmp.lt.s32.totalorder %s27, 1
        %s2236 = scalar_select %p2235, %s27, 1
        %s2237 = smul.addr %s2236, 8
        %s2238 = scalar_lea.vmem %s3, %s2237
        %p2239 = scmp.lt.s32.totalorder %s27, 1
        %s2240 = scalar_select %p2239, %s27, 1
        %s2241 = smul.addr %s2240, 8
        %s2242 = scalar_lea.vmem %s4, %s2241
        %p2243 = scmp.lt.s32.totalorder %s27, 1
        %s2244 = scalar_select %p2243, %s27, 1
        %s2245 = smul.addr %s2244, 8
        %s2246 = scalar_lea.vmem %s5, %s2245
        // Predicated region
        $region49: #{tpu_custom_call.1} parent=31 // pred_check
          %p2247 = pneg %p130
        $region50: #{tpu_custom_call.1} parent=31 // pred_check_branch
          %2249 = sbr.rel (%p2247) target = $region52
        $region51: #{tpu_custom_call.1} parent=31 // pred_region
          _
        $region52: #{tpu_custom_call.1} parent=31 // pred_fallthru
          _
        // Predicated region
        $region53: #{tpu_custom_call.1} parent=31 // pred_check
          %p2250 = pneg %p156
        $region54: #{tpu_custom_call.1} parent=31 // pred_check_branch
          %2252 = sbr.rel (%p2250) target = $region56
        $region55: #{tpu_custom_call.1} parent=31 // pred_region
          _
        $region56: #{tpu_custom_call.1} parent=31 // pred_fallthru
          _
        // Predicated region
        $region57: #{tpu_custom_call.1} parent=31 // pred_check
          %p2253 = pneg %p182
        $region58: #{tpu_custom_call.1} parent=31 // pred_check_branch
          %2255 = sbr.rel (%p2253) target = $region60
        $region59: #{tpu_custom_call.1} parent=31 // pred_region
          _
        $region60: #{tpu_custom_call.1} parent=31 // pred_fallthru
          _
      $region32: #{tpu_custom_call.1} parent=5 // pred_fallthru
        _
      %p2256 = scmp.le.s32.totalorder 2, %s18
      // Predicated region
      $region61: #{tpu_custom_call.1} parent=5 // pred_check
        %p2257 = pneg %p2256
      $region62: #{tpu_custom_call.1} parent=5 // pred_check_branch
        %2259 = sbr.rel (%p2257) target = $region64
      $region63: #{tpu_custom_call.1} parent=5 // pred_region
        %s2260 = ssub.s32 %s18, 2
        // Predicated region
        $region65: #{tpu_custom_call.1} parent=63 // pred_check
          %p2261 = pneg %p136
        $region66: #{tpu_custom_call.1} parent=63 // pred_check_branch
          %2263 = sbr.rel (%p2261) target = $region68
        $region67: #{tpu_custom_call.1} parent=63 // pred_region
          %p2264 = scmp.lt.s32.totalorder %s29, 1
          %s2265 = scalar_select %p2264, %s29, 1
          %s2266 = smul.addr %s2265, 8
          %s2267 = scalar_lea.vmem %s3, %s2266
        $region68: #{tpu_custom_call.1} parent=63 // pred_fallthru
          _
        // Predicated region
        $region69: #{tpu_custom_call.1} parent=63 // pred_check
          %p2268 = pneg %p162
        $region70: #{tpu_custom_call.1} parent=63 // pred_check_branch
          %2270 = sbr.rel (%p2268) target = $region72
        $region71: #{tpu_custom_call.1} parent=63 // pred_region
          %p2271 = scmp.lt.s32.totalorder %s29, 1
          %s2272 = scalar_select %p2271, %s29, 1
          %s2273 = smul.addr %s2272, 8
          %s2274 = scalar_lea.vmem %s4, %s2273
        $region72: #{tpu_custom_call.1} parent=63 // pred_fallthru
          _
        // Predicated region
        $region73: #{tpu_custom_call.1} parent=63 // pred_check
          %p2275 = pneg %p188
        $region74: #{tpu_custom_call.1} parent=63 // pred_check_branch
          %2277 = sbr.rel (%p2275) target = $region76
        $region75: #{tpu_custom_call.1} parent=63 // pred_region
          %p2278 = scmp.lt.s32.totalorder %s29, 1
          %s2279 = scalar_select %p2278, %s29, 1
          %s2280 = smul.addr %s2279, 8
          %s2281 = scalar_lea.vmem %s5, %s2280
        $region76: #{tpu_custom_call.1} parent=63 // pred_fallthru
          _
      $region64: #{tpu_custom_call.1} parent=5 // pred_fallthru
        _
    $region6: #{tpu_custom_call.1} parent=1 // loop_footer
      %s22 = sadd.s32 1, %s18
    $region7: #{tpu_custom_call.1} parent=1 // loop_footer_branch
      %17 = sbr.rel target = $region3
    $region8: #{tpu_custom_call.1} parent=1 // loop_exit
      _
    %2282 = vsyncpa [#allocation3], 1
    %s2283 = scalar_lea.sflag [#allocation3], 1
    %2284 = vsyncpa %s2283, 1
    %2285 = vsyncpa [#allocation5], 1
    %s2286 = scalar_lea.sflag [#allocation5], 1
    %2287 = vsyncpa %s2286, 1

</llo_original>
